<compile_context>
chip_gen: v5e
topology: v5e:2x2
jax: 0.10.0
libtpu: 0.0.40
codegen_flags: <defaults>
</compile_context>

<pallas_src>
import functools

import numpy as np
import jax
import jax.numpy as jnp
from jax.experimental import pallas as pl
from jax.experimental.pallas import tpu as pltpu


# ----------------------------------------------------------------------------
# Fused kernel: conv stack + fc/LayerNorm/tanh + (implicit concat) + double-Q
# ----------------------------------------------------------------------------
def _critic_kernel(obs_ref, act_ref, *refs,
                   bb, row_pitch, conv_shifts, oh_last, n_q_extra):
    """One grid step == `bb` batch elements.

    obs_ref : [bb*row_pitch, W*C]  channels-last obs; each sample's rows are
                                   ordered [even | odd] so the stride-2 first
                                   conv reads contiguous row slices.
    act_ref : [bb, A]
    refs    : packed weights (see make_params) followed by the output ref.
    """
    out_ref = refs[-1]
    w = refs[:-1]
    f32 = jnp.float32
    cdt = obs_ref.dtype                       # matmul operand dtype (f32/bf16)

    # ---- conv stack: K shifted matmuls per layer, activations stay in VMEM --
    # Valid rows of each sample keep pitch `row_pitch`; trailing rows per sample
    # are don't-care filler (never read by downstream valid rows).
    h = obs_ref[...]                          # [bb*row_pitch, W*C]
    rows = h.shape[0]
    wi = 0
    for shifts in conv_shifts:
        m_ref, b_ref = w[wi], w[wi + 1]
        wi += 2
        rows_out = rows - max(shifts)
        acc = jnp.zeros((rows_out, m_ref.shape[2]), f32)
        for kh, s in enumerate(shifts):
            acc = acc + jnp.dot(h[s:s + rows_out, :], m_ref[kh],
                                preferred_element_type=f32)
        h = jnp.maximum(acc + b_ref[...], 0.0).astype(cdt)
        rows = rows_out

    # ---- encoder head: flatten (batched) -> Linear -> LayerNorm -> tanh -----
    fc_w, fc_b, ln_g, ln_b = w[wi], w[wi + 1], w[wi + 2], w[wi + 3]
    wi += 4
    rowlen = h.shape[1]
    feat_dim = fc_w.shape[1]
    y = jnp.zeros((bb, feat_dim), f32)
    for oh in range(oh_last):                 # one batched matmul per conv row
        xo = jnp.concatenate(
            [h[b * row_pitch + oh:b * row_pitch + oh + 1, :] for b in range(bb)],
            axis=0)                           # [bb, rowlen]
        y = y + jnp.dot(xo, fc_w[oh * rowlen:(oh + 1) * rowlen, :],
                        preferred_element_type=f32)
    y = y + fc_b[...]
    mean = jnp.mean(y, axis=-1, keepdims=True)
    var = jnp.mean((y - mean) ** 2, axis=-1, keepdims=True)   # biased (torch LN)
    feat = jnp.tanh((y - mean) * jax.lax.rsqrt(var + 1e-5) * ln_g[...]
                    + ln_b[...])

    # ---- double-Q MLP (Q1/Q2 merged along N; deeper layers block-diagonal) --
    act = act_ref[...]                        # [bb, A]
    w0f, w0a, b0 = w[wi], w[wi + 1], w[wi + 2]
    wi += 3
    hq = (jnp.dot(feat.astype(cdt), w0f[...], preferred_element_type=f32)
          + jnp.dot(act, w0a[...], preferred_element_type=f32) + b0[...])
    hq = jnp.maximum(hq, 0.0)
    for _ in range(n_q_extra):                # extra hidden layers (ReLU)
        hq = jnp.maximum(
            jnp.dot(hq.astype(cdt), w[wi][...], preferred_element_type=f32)
            + w[wi + 1][...], 0.0)
        wi += 2
    q = (jnp.dot(hq.astype(cdt), w[wi][...], preferred_element_type=f32)
         + w[wi + 1][...])                    # [bb, 2] = (q1, q2)
    out_ref[...] = q.astype(out_ref.dtype)


# ----------------------------------------------------------------------------
# Forward wrapper: one pallas_call for the whole critic
# ----------------------------------------------------------------------------
def critic_forward(params, obs, action, *, block_b=8):
    """obs: [B, C, H, W] pixels in [0, 255]; action: [B, A]."""
    assert obs.shape[0] == action.shape[0]
    B, C, H, W = obs.shape
    A = action.shape[1]
    assert H % 2 == 0

    weights = params["weights"]
    conv_shifts = params["conv_shifts"]
    oh_last = params["oh_last"]
    n_q_extra = params["n_q_extra"]
    cdt = weights[0].dtype                    # matmul operand dtype

    bb = int(min(block_b, B))                 # samples per grid step
    b_pad = ((B + bb - 1) // bb) * bb
    num_blocks = b_pad // bb

    # NCHW -> channels-last with each sample's rows reordered [even | odd];
    # this is folded into the single relayout that would be needed anyway
    # (one fused transpose), and cast to the matmul operand dtype.
    obs_r = (obs.reshape(B, C, H // 2, 2, W)
                .transpose(0, 3, 2, 4, 1)     # [B, parity, H//2, W, C]
                .reshape(B, H, W * C)
                .astype(cdt))
    act_p = action.astype(cdt)
    if b_pad != B:
        obs_r = jnp.pad(obs_r, ((0, b_pad - B), (0, 0), (0, 0)))
        act_p = jnp.pad(act_p, ((0, b_pad - B), (0, 0)))
    obs2 = obs_r.reshape(b_pad * H, W * C)

    def _const_map(ndim):
        zeros = (0,) * ndim
        return lambda b: zeros

    # TODO(synk): for production shapes, add pipeline_mode=pl.Buffered(1) to the
    # weight specs (they are constant across the grid) or stream them from HBM.
    in_specs = [
        pl.BlockSpec((bb * H, W * C), lambda b: (b, 0)),
        pl.BlockSpec((bb, A), lambda b: (b, 0)),
    ] + [pl.BlockSpec(wt.shape, _const_map(wt.ndim)) for wt in weights]
    out_specs = pl.BlockSpec((bb, 2), lambda b: (b, 0))

    # advisory cost estimate
    flops = 0
    rows = bb * H
    wi = 0
    for shifts in conv_shifts:
        m = weights[wi]
        wi += 2
        rows = rows - max(shifts)
        flops += 2 * len(shifts) * rows * m.shape[1] * m.shape[2]
    feat_dim = weights[wi].shape[1]
    for wt in weights[wi:]:
        if wt.ndim == 2 and wt.shape[0] > 1:  # skip biases / LN params
            flops += 2 * bb * wt.shape[0] * wt.shape[1]
    flops *= num_blocks
    cost = pl.CostEstimate(
        flops=int(flops),
        transcendentals=int(b_pad * (feat_dim + 2)),
        bytes_accessed=int(obs2.size * obs2.dtype.itemsize
                           + act_p.size * act_p.dtype.itemsize
                           + b_pad * 2 * 4
                           + sum(int(wt.size) * wt.dtype.itemsize
                                 for wt in weights)))

    kernel = functools.partial(
        _critic_kernel, bb=bb, row_pitch=H, conv_shifts=conv_shifts,
        oh_last=oh_last, n_q_extra=n_q_extra)

    q = pl.pallas_call(
        kernel,
        out_shape=jax.ShapeDtypeStruct((b_pad, 2), jnp.float32),
        grid=(num_blocks,),
        in_specs=in_specs,
        out_specs=out_specs,
        compiler_params=pltpu.CompilerParams(
            dimension_semantics=("parallel",),
            vmem_limit_bytes=48 * 1024 * 1024),
        cost_estimate=cost,
    )(obs2, act_p, *weights)

    q = q[:B]
    return q[:, 0:1], q[:, 1:2]


# ----------------------------------------------------------------------------
# Parameter construction / packing
# ----------------------------------------------------------------------------
def _conv_to_row_matmuls(w, b, w_in, stride, scale=1.0):
    """Pack an [OC, IC, K, K] conv weight into K block-Toeplitz matrices so that
    for channels-last activations laid out as [rows, W_in*IC]:
        conv(x)[oh, ow*OC + oc] = sum_kh  x_row(oh*stride + kh) @ M[kh]
    TODO(synk): these are only ~K/W dense; re-pack (im2col) or stream from HBM
    before scaling to 84x84 encoders.
    """
    w = np.asarray(w, np.float32) * scale
    b = np.asarray(b, np.float32)
    OC, IC, K, _ = w.shape
    OW = (w_in - K) // stride + 1
    M = np.zeros((K, w_in * IC, OW * OC), np.float32)
    for kh in range(K):
        for kw in range(K):
            blk = w[:, :, kh, kw].T                          # [IC, OC]
            for ow in range(OW):
                wi = ow * stride + kw
                M[kh, wi * IC:(wi + 1) * IC, ow * OC:(ow + 1) * OC] = blk
    b_row = np.tile(b, OW).reshape(1, OW * OC)
    return jnp.asarray(M), jnp.asarray(b_row)


def make_params(key, obs_shape, action_dim, feature_dim, hidden_dim,
                hidden_depth, compute_dtype=jnp.float32):
    assert hidden_depth >= 1
    C, H, W = obs_shape
    NF = 32
    conv_defs = [(C, NF, 3, 2), (NF, NF, 3, 1), (NF, NF, 3, 1), (NF, NF, 3, 1)]
    keys = iter(jax.random.split(key, 64))

    def nrm(shape, scale=0.1):
        return jax.random.normal(next(keys), shape, jnp.float32) * scale

    weights, matmul_flags = [], []

    def add(wt, is_matmul):
        weights.append(wt)
        matmul_flags.append(is_matmul)

    conv_shifts, raw_conv = [], []
    h_in, w_in = H, W
    for li, (ic, oc, k, s) in enumerate(conv_defs):
        wt = nrm((oc, ic, k, k))
        bt = jnp.zeros((oc,), jnp.float32)
        raw_conv.append((wt, bt, s))
        M, b_row = _conv_to_row_matmuls(
            wt, bt, w_in, s, scale=(1.0 / 255.0 if li == 0 else 1.0))
        add(M, True)
        add(b_row, False)
        oh = (h_in - k) // s + 1
        ow = (w_in - k) // s + 1
        if s == 2:
            # input rows are laid out [even | odd]: original row 2*oh + kh
            # lives at (kh % 2) * (h_in // 2) + oh + kh // 2
            conv_shifts.append(tuple((kh % 2) * (h_in // 2) + kh // 2
                                     for kh in range(k)))
        else:
            conv_shifts.append(tuple(range(k)))
        h_in, w_in = oh, ow
    flat_dim = NF * oh * ow
    oh_last = oh

    fc_w = nrm((flat_dim, feature_dim))
    fc_b = jnp.zeros((1, feature_dim), jnp.float32)
    ln_g = jnp.ones((1, feature_dim), jnp.float32)
    ln_b = jnp.zeros((1, feature_dim), jnp.float32)
    add(fc_w, True); add(fc_b, False); add(ln_g, False); add(ln_b, False)

    dims = [feature_dim + action_dim] + [hidden_dim] * hidden_depth + [1]

    def q_layers():
        return [(nrm((dims[i], dims[i + 1]), 0.3),
                 jnp.zeros((dims[i + 1],), jnp.float32))
                for i in range(len(dims) - 1)]

    q1, q2 = q_layers(), q_layers()

    # merged layer 0 (consumes [feat | action]; Q1/Q2 concatenated along N),
    # split by rows into a feat part and an action part (implicit concat).
    w0 = jnp.concatenate([q1[0][0], q2[0][0]], axis=1)       # [F+A, 2*Hd]
    b0 = jnp.concatenate([q1[0][1], q2[0][1]]).reshape(1, -1)
    add(w0[:feature_dim, :], True)
    add(w0[feature_dim:, :], True)
    add(b0, False)
    # deeper layers: block-diagonal merge (Q1 block | Q2 block)
    for i in range(1, len(dims) - 1):
        (wa, ba), (wb, b2_) = q1[i], q2[i]
        top = jnp.concatenate([wa, jnp.zeros_like(wb)], axis=1)
        bot = jnp.concatenate([jnp.zeros_like(wa), wb], axis=1)
        add(jnp.concatenate([top, bot], axis=0), True)
        add(jnp.concatenate([ba, b2_]).reshape(1, -1), False)

    # bf16 MXU operands (accumulation stays f32 in-kernel); biases/LN stay f32.
    if compute_dtype != jnp.float32:
        weights = [wt.astype(compute_dtype) if mm else wt
                   for wt, mm in zip(weights, matmul_flags)]

    raw = {"conv": raw_conv, "fc_w": fc_w, "fc_b": fc_b,
           "ln_g": ln_g, "ln_b": ln_b, "Q1": q1, "Q2": q2}
    return {"weights": weights, "conv_shifts": tuple(conv_shifts),
            "oh_last": int(oh_last), "n_q_extra": hidden_depth - 1, "raw": raw}


# ----------------------------------------------------------------------------
# Pure-JAX reference (mirrors the PyTorch module) for the in-script check
# ----------------------------------------------------------------------------
def critic_forward_reference(raw, obs, action):
    h = obs.astype(jnp.float32) / 255.0
    for (wt, bt, s) in raw["conv"]:
        h = jax.lax.conv_general_dilated(
            h, wt, window_strides=(s, s), padding="VALID",
            dimension_numbers=("NCHW", "OIHW", "NCHW"))
        h = jnp.maximum(h + bt.reshape(1, -1, 1, 1), 0.0)
    B = obs.shape[0]
    h = h.transpose(0, 2, 3, 1).reshape(B, -1)   # (h, w, c) flatten order
    y = h @ raw["fc_w"] + raw["fc_b"]
    mean = y.mean(-1, keepdims=True)
    var = ((y - mean) ** 2).mean(-1, keepdims=True)
    feat = jnp.tanh((y - mean) / jnp.sqrt(var + 1e-5) * raw["ln_g"] + raw["ln_b"])
    oa = jnp.concatenate([feat, action], axis=-1)

    def mlp(z, layers):
        for i, (wt, bt) in enumerate(layers):
            z = z @ wt + bt
            if i < len(layers) - 1:
                z = jnp.maximum(z, 0.0)
        return z

    return mlp(oa, raw["Q1"]), mlp(oa, raw["Q2"])


# ----------------------------------------------------------------------------
if __name__ == "__main__":
    key = jax.random.PRNGKey(0)
    k_obs, k_act, k_par = jax.random.split(key, 3)

    # small shapes: batch=2, channels=4, spatial=16x16, action_dim=4,
    # feature_dim=32, hidden_dim=32, hidden_depth=2
    B, C, H, W = 2, 4, 16, 16
    action_dim, feature_dim, hidden_dim, hidden_depth = 4, 32, 32, 2

    # integer-valued pixels (exactly representable in bf16)
    obs = jax.random.randint(k_obs, (B, C, H, W), 0, 256).astype(jnp.float32)
    action = jax.random.uniform(k_act, (B, action_dim), jnp.float32, -1.0, 1.0)

    # ---- float32 matmul path: structural correctness check ------------------
    params = make_params(k_par, (C, H, W), action_dim, feature_dim,
                         hidden_dim, hidden_depth, compute_dtype=jnp.float32)
    q1, q2 = critic_forward(params, obs, action)
    jax.block_until_ready((q1, q2))
    assert q1.shape == (B, 1) and q2.shape == (B, 1)

    with jax.default_matmul_precision("float32"):
        r1, r2 = critic_forward_reference(params["raw"], obs, action)
    assert jnp.allclose(q1, r1, atol=2e-2, rtol=2e-2), (q1, r1)
    assert jnp.allclose(q2, r2, atol=2e-2, rtol=2e-2), (q2, r2)

    # ---- bfloat16 matmul path (MXU-native operands, f32 accumulation) -------
    params_bf16 = make_params(k_par, (C, H, W), action_dim, feature_dim,
                              hidden_dim, hidden_depth,
                              compute_dtype=jnp.bfloat16)
    b1, b2 = critic_forward(params_bf16, obs, action)
    jax.block_until_ready((b1, b2))
    assert jnp.allclose(b1, r1, atol=1.5e-1, rtol=1.5e-1), (b1, r1)
    assert jnp.allclose(b2, r2, atol=1.5e-1, rtol=1.5e-1), (b2, r2)

    print("KERNEL_OK")
</pallas_src>

<mosaic_0001>
module attributes {stable_mosaic.version = 11 : i64} {
  func.func @_critic_kernel(%arg0: i32, %arg1: memref<32x64xf32, #tpu.memory_space<vmem>>, %arg2: memref<2x4xf32, #tpu.memory_space<vmem>>, %arg3: memref<3x64x224xf32, #tpu.memory_space<vmem>>, %arg4: memref<1x224xf32, #tpu.memory_space<vmem>>, %arg5: memref<3x224x160xf32, #tpu.memory_space<vmem>>, %arg6: memref<1x160xf32, #tpu.memory_space<vmem>>, %arg7: memref<3x160x96xf32, #tpu.memory_space<vmem>>, %arg8: memref<1x96xf32, #tpu.memory_space<vmem>>, %arg9: memref<3x96x32xf32, #tpu.memory_space<vmem>>, %arg10: memref<1x32xf32, #tpu.memory_space<vmem>>, %arg11: memref<32x32xf32, #tpu.memory_space<vmem>>, %arg12: memref<1x32xf32, #tpu.memory_space<vmem>>, %arg13: memref<1x32xf32, #tpu.memory_space<vmem>>, %arg14: memref<1x32xf32, #tpu.memory_space<vmem>>, %arg15: memref<32x64xf32, #tpu.memory_space<vmem>>, %arg16: memref<4x64xf32, #tpu.memory_space<vmem>>, %arg17: memref<1x64xf32, #tpu.memory_space<vmem>>, %arg18: memref<64x64xf32, #tpu.memory_space<vmem>>, %arg19: memref<1x64xf32, #tpu.memory_space<vmem>>, %arg20: memref<64x2xf32, #tpu.memory_space<vmem>>, %arg21: memref<1x2xf32, #tpu.memory_space<vmem>>, %arg22: memref<2x2xf32, #tpu.memory_space<vmem>>) attributes {dimension_semantics = [#tpu.dimension_semantics<parallel>], iteration_bounds = array<i64: 1>, scalar_prefetch = 0 : i64, scratch_operands = 0 : i64, tpu.core_type = #tpu.core_type<tc>, window_params = [{transform_indices = @transform_0, window_bounds = array<i64: 32, 64>}, {transform_indices = @transform_1, window_bounds = array<i64: 2, 4>}, {pipeline_mode = #tpu.pipeline_mode<synchronous>, transform_indices = @transform_2, window_bounds = array<i64: 3, 64, 224>}, {pipeline_mode = #tpu.pipeline_mode<synchronous>, transform_indices = @transform_3, window_bounds = array<i64: 1, 224>}, {pipeline_mode = #tpu.pipeline_mode<synchronous>, transform_indices = @transform_4, window_bounds = array<i64: 3, 224, 160>}, {pipeline_mode = #tpu.pipeline_mode<synchronous>, transform_indices = @transform_5, window_bounds = array<i64: 1, 160>}, {pipeline_mode = #tpu.pipeline_mode<synchronous>, transform_indices = @transform_6, window_bounds = array<i64: 3, 160, 96>}, {pipeline_mode = #tpu.pipeline_mode<synchronous>, transform_indices = @transform_7, window_bounds = array<i64: 1, 96>}, {pipeline_mode = #tpu.pipeline_mode<synchronous>, transform_indices = @transform_8, window_bounds = array<i64: 3, 96, 32>}, {pipeline_mode = #tpu.pipeline_mode<synchronous>, transform_indices = @transform_9, window_bounds = array<i64: 1, 32>}, {pipeline_mode = #tpu.pipeline_mode<synchronous>, transform_indices = @transform_10, window_bounds = array<i64: 32, 32>}, {pipeline_mode = #tpu.pipeline_mode<synchronous>, transform_indices = @transform_11, window_bounds = array<i64: 1, 32>}, {pipeline_mode = #tpu.pipeline_mode<synchronous>, transform_indices = @transform_12, window_bounds = array<i64: 1, 32>}, {pipeline_mode = #tpu.pipeline_mode<synchronous>, transform_indices = @transform_13, window_bounds = array<i64: 1, 32>}, {pipeline_mode = #tpu.pipeline_mode<synchronous>, transform_indices = @transform_14, window_bounds = array<i64: 32, 64>}, {pipeline_mode = #tpu.pipeline_mode<synchronous>, transform_indices = @transform_15, window_bounds = array<i64: 4, 64>}, {pipeline_mode = #tpu.pipeline_mode<synchronous>, transform_indices = @transform_16, window_bounds = array<i64: 1, 64>}, {pipeline_mode = #tpu.pipeline_mode<synchronous>, transform_indices = @transform_17, window_bounds = array<i64: 64, 64>}, {pipeline_mode = #tpu.pipeline_mode<synchronous>, transform_indices = @transform_18, window_bounds = array<i64: 1, 64>}, {pipeline_mode = #tpu.pipeline_mode<synchronous>, transform_indices = @transform_19, window_bounds = array<i64: 64, 2>}, {pipeline_mode = #tpu.pipeline_mode<synchronous>, transform_indices = @transform_20, window_bounds = array<i64: 1, 2>}, {transform_indices = @transform_21, window_bounds = array<i64: 2, 2>}]} {
    %c0 = arith.constant 0 : index
    %c0_0 = arith.constant 0 : index
    %0 = vector.load %arg1[%c0, %c0_0] : memref<32x64xf32, #tpu.memory_space<vmem>>, vector<32x64xf32>
    %cst = arith.constant 0.000000e+00 : f32
    %1 = vector.broadcast %cst : f32 to vector<24x224xf32>
    %2 = vector.extract_strided_slice %0 {offsets = [0, 0], sizes = [24, 64], strides = [1, 1]} : vector<32x64xf32> to vector<24x64xf32>
    %c0_1 = arith.constant 0 : index
    %c0_2 = arith.constant 0 : index
    %c0_3 = arith.constant 0 : index
    %3 = vector.load %arg3[%c0_1, %c0_2, %c0_3] : memref<3x64x224xf32, #tpu.memory_space<vmem>>, vector<1x64x224xf32>
    %4 = vector.shape_cast %3 : vector<1x64x224xf32> to vector<64x224xf32>
    %cst_4 = arith.constant dense<0.000000e+00> : vector<24x224xf32>
    %5 = tpu.matmul %2, %4, %cst_4 {dimension_numbers = #tpu.dot_dimension_numbers<[1], [0], [0], [1], [0, 0, 1, 1], [], []>} : vector<24x64xf32>, vector<64x224xf32>, vector<24x224xf32> -> vector<24x224xf32>
    %6 = arith.addf %1, %5 : vector<24x224xf32>
    %7 = vector.extract_strided_slice %0 {offsets = [8, 0], sizes = [24, 64], strides = [1, 1]} : vector<32x64xf32> to vector<24x64xf32>
    %c1 = arith.constant 1 : index
    %c0_5 = arith.constant 0 : index
    %c0_6 = arith.constant 0 : index
    %8 = vector.load %arg3[%c1, %c0_5, %c0_6] : memref<3x64x224xf32, #tpu.memory_space<vmem>>, vector<1x64x224xf32>
    %9 = vector.shape_cast %8 : vector<1x64x224xf32> to vector<64x224xf32>
    %cst_7 = arith.constant dense<0.000000e+00> : vector<24x224xf32>
    %10 = tpu.matmul %7, %9, %cst_7 {dimension_numbers = #tpu.dot_dimension_numbers<[1], [0], [0], [1], [0, 0, 1, 1], [], []>} : vector<24x64xf32>, vector<64x224xf32>, vector<24x224xf32> -> vector<24x224xf32>
    %11 = arith.addf %6, %10 : vector<24x224xf32>
    %12 = vector.extract_strided_slice %0 {offsets = [1, 0], sizes = [24, 64], strides = [1, 1]} : vector<32x64xf32> to vector<24x64xf32>
    %c2 = arith.constant 2 : index
    %c0_8 = arith.constant 0 : index
    %c0_9 = arith.constant 0 : index
    %13 = vector.load %arg3[%c2, %c0_8, %c0_9] : memref<3x64x224xf32, #tpu.memory_space<vmem>>, vector<1x64x224xf32>
    %14 = vector.shape_cast %13 : vector<1x64x224xf32> to vector<64x224xf32>
    %cst_10 = arith.constant dense<0.000000e+00> : vector<24x224xf32>
    %15 = tpu.matmul %12, %14, %cst_10 {dimension_numbers = #tpu.dot_dimension_numbers<[1], [0], [0], [1], [0, 0, 1, 1], [], []>} : vector<24x64xf32>, vector<64x224xf32>, vector<24x224xf32> -> vector<24x224xf32>
    %16 = arith.addf %11, %15 : vector<24x224xf32>
    %c0_11 = arith.constant 0 : index
    %c0_12 = arith.constant 0 : index
    %17 = vector.load %arg4[%c0_11, %c0_12] : memref<1x224xf32, #tpu.memory_space<vmem>>, vector<1x224xf32>
    %18 = vector.broadcast %17 : vector<1x224xf32> to vector<24x224xf32>
    %19 = arith.addf %16, %18 : vector<24x224xf32>
    %cst_13 = arith.constant 0.000000e+00 : f32
    %20 = vector.broadcast %cst_13 : f32 to vector<24x224xf32>
    %21 = arith.maximumf %19, %20 : vector<24x224xf32>
    %cst_14 = arith.constant 0.000000e+00 : f32
    %22 = vector.broadcast %cst_14 : f32 to vector<22x160xf32>
    %23 = vector.extract_strided_slice %21 {offsets = [0, 0], sizes = [22, 224], strides = [1, 1]} : vector<24x224xf32> to vector<22x224xf32>
    %c0_15 = arith.constant 0 : index
    %c0_16 = arith.constant 0 : index
    %c0_17 = arith.constant 0 : index
    %24 = vector.load %arg5[%c0_15, %c0_16, %c0_17] : memref<3x224x160xf32, #tpu.memory_space<vmem>>, vector<1x224x160xf32>
    %25 = vector.shape_cast %24 : vector<1x224x160xf32> to vector<224x160xf32>
    %cst_18 = arith.constant dense<0.000000e+00> : vector<22x160xf32>
    %26 = tpu.matmul %23, %25, %cst_18 {dimension_numbers = #tpu.dot_dimension_numbers<[1], [0], [0], [1], [0, 0, 1, 1], [], []>} : vector<22x224xf32>, vector<224x160xf32>, vector<22x160xf32> -> vector<22x160xf32>
    %27 = arith.addf %22, %26 : vector<22x160xf32>
    %28 = vector.extract_strided_slice %21 {offsets = [1, 0], sizes = [22, 224], strides = [1, 1]} : vector<24x224xf32> to vector<22x224xf32>
    %c1_19 = arith.constant 1 : index
    %c0_20 = arith.constant 0 : index
    %c0_21 = arith.constant 0 : index
    %29 = vector.load %arg5[%c1_19, %c0_20, %c0_21] : memref<3x224x160xf32, #tpu.memory_space<vmem>>, vector<1x224x160xf32>
    %30 = vector.shape_cast %29 : vector<1x224x160xf32> to vector<224x160xf32>
    %cst_22 = arith.constant dense<0.000000e+00> : vector<22x160xf32>
    %31 = tpu.matmul %28, %30, %cst_22 {dimension_numbers = #tpu.dot_dimension_numbers<[1], [0], [0], [1], [0, 0, 1, 1], [], []>} : vector<22x224xf32>, vector<224x160xf32>, vector<22x160xf32> -> vector<22x160xf32>
    %32 = arith.addf %27, %31 : vector<22x160xf32>
    %33 = vector.extract_strided_slice %21 {offsets = [2, 0], sizes = [22, 224], strides = [1, 1]} : vector<24x224xf32> to vector<22x224xf32>
    %c2_23 = arith.constant 2 : index
    %c0_24 = arith.constant 0 : index
    %c0_25 = arith.constant 0 : index
    %34 = vector.load %arg5[%c2_23, %c0_24, %c0_25] : memref<3x224x160xf32, #tpu.memory_space<vmem>>, vector<1x224x160xf32>
    %35 = vector.shape_cast %34 : vector<1x224x160xf32> to vector<224x160xf32>
    %cst_26 = arith.constant dense<0.000000e+00> : vector<22x160xf32>
    %36 = tpu.matmul %33, %35, %cst_26 {dimension_numbers = #tpu.dot_dimension_numbers<[1], [0], [0], [1], [0, 0, 1, 1], [], []>} : vector<22x224xf32>, vector<224x160xf32>, vector<22x160xf32> -> vector<22x160xf32>
    %37 = arith.addf %32, %36 : vector<22x160xf32>
    %c0_27 = arith.constant 0 : index
    %c0_28 = arith.constant 0 : index
    %38 = vector.load %arg6[%c0_27, %c0_28] : memref<1x160xf32, #tpu.memory_space<vmem>>, vector<1x160xf32>
    %39 = vector.broadcast %38 : vector<1x160xf32> to vector<22x160xf32>
    %40 = arith.addf %37, %39 : vector<22x160xf32>
    %cst_29 = arith.constant 0.000000e+00 : f32
    %41 = vector.broadcast %cst_29 : f32 to vector<22x160xf32>
    %42 = arith.maximumf %40, %41 : vector<22x160xf32>
    %cst_30 = arith.constant 0.000000e+00 : f32
    %43 = vector.broadcast %cst_30 : f32 to vector<20x96xf32>
    %44 = vector.extract_strided_slice %42 {offsets = [0, 0], sizes = [20, 160], strides = [1, 1]} : vector<22x160xf32> to vector<20x160xf32>
    %c0_31 = arith.constant 0 : index
    %c0_32 = arith.constant 0 : index
    %c0_33 = arith.constant 0 : index
    %45 = vector.load %arg7[%c0_31, %c0_32, %c0_33] : memref<3x160x96xf32, #tpu.memory_space<vmem>>, vector<1x160x96xf32>
    %46 = vector.shape_cast %45 : vector<1x160x96xf32> to vector<160x96xf32>
    %cst_34 = arith.constant dense<0.000000e+00> : vector<20x96xf32>
    %47 = tpu.matmul %44, %46, %cst_34 {dimension_numbers = #tpu.dot_dimension_numbers<[1], [0], [0], [1], [0, 0, 1, 1], [], []>} : vector<20x160xf32>, vector<160x96xf32>, vector<20x96xf32> -> vector<20x96xf32>
    %48 = arith.addf %43, %47 : vector<20x96xf32>
    %49 = vector.extract_strided_slice %42 {offsets = [1, 0], sizes = [20, 160], strides = [1, 1]} : vector<22x160xf32> to vector<20x160xf32>
    %c1_35 = arith.constant 1 : index
    %c0_36 = arith.constant 0 : index
    %c0_37 = arith.constant 0 : index
    %50 = vector.load %arg7[%c1_35, %c0_36, %c0_37] : memref<3x160x96xf32, #tpu.memory_space<vmem>>, vector<1x160x96xf32>
    %51 = vector.shape_cast %50 : vector<1x160x96xf32> to vector<160x96xf32>
    %cst_38 = arith.constant dense<0.000000e+00> : vector<20x96xf32>
    %52 = tpu.matmul %49, %51, %cst_38 {dimension_numbers = #tpu.dot_dimension_numbers<[1], [0], [0], [1], [0, 0, 1, 1], [], []>} : vector<20x160xf32>, vector<160x96xf32>, vector<20x96xf32> -> vector<20x96xf32>
    %53 = arith.addf %48, %52 : vector<20x96xf32>
    %54 = vector.extract_strided_slice %42 {offsets = [2, 0], sizes = [20, 160], strides = [1, 1]} : vector<22x160xf32> to vector<20x160xf32>
    %c2_39 = arith.constant 2 : index
    %c0_40 = arith.constant 0 : index
    %c0_41 = arith.constant 0 : index
    %55 = vector.load %arg7[%c2_39, %c0_40, %c0_41] : memref<3x160x96xf32, #tpu.memory_space<vmem>>, vector<1x160x96xf32>
    %56 = vector.shape_cast %55 : vector<1x160x96xf32> to vector<160x96xf32>
    %cst_42 = arith.constant dense<0.000000e+00> : vector<20x96xf32>
    %57 = tpu.matmul %54, %56, %cst_42 {dimension_numbers = #tpu.dot_dimension_numbers<[1], [0], [0], [1], [0, 0, 1, 1], [], []>} : vector<20x160xf32>, vector<160x96xf32>, vector<20x96xf32> -> vector<20x96xf32>
    %58 = arith.addf %53, %57 : vector<20x96xf32>
    %c0_43 = arith.constant 0 : index
    %c0_44 = arith.constant 0 : index
    %59 = vector.load %arg8[%c0_43, %c0_44] : memref<1x96xf32, #tpu.memory_space<vmem>>, vector<1x96xf32>
    %60 = vector.broadcast %59 : vector<1x96xf32> to vector<20x96xf32>
    %61 = arith.addf %58, %60 : vector<20x96xf32>
    %cst_45 = arith.constant 0.000000e+00 : f32
    %62 = vector.broadcast %cst_45 : f32 to vector<20x96xf32>
    %63 = arith.maximumf %61, %62 : vector<20x96xf32>
    %cst_46 = arith.constant 0.000000e+00 : f32
    %64 = vector.broadcast %cst_46 : f32 to vector<18x32xf32>
    %65 = vector.extract_strided_slice %63 {offsets = [0, 0], sizes = [18, 96], strides = [1, 1]} : vector<20x96xf32> to vector<18x96xf32>
    %c0_47 = arith.constant 0 : index
    %c0_48 = arith.constant 0 : index
    %c0_49 = arith.constant 0 : index
    %66 = vector.load %arg9[%c0_47, %c0_48, %c0_49] : memref<3x96x32xf32, #tpu.memory_space<vmem>>, vector<1x96x32xf32>
    %67 = vector.shape_cast %66 : vector<1x96x32xf32> to vector<96x32xf32>
    %cst_50 = arith.constant dense<0.000000e+00> : vector<18x32xf32>
    %68 = tpu.matmul %65, %67, %cst_50 {dimension_numbers = #tpu.dot_dimension_numbers<[1], [0], [0], [1], [0, 0, 1, 1], [], []>} : vector<18x96xf32>, vector<96x32xf32>, vector<18x32xf32> -> vector<18x32xf32>
    %69 = arith.addf %64, %68 : vector<18x32xf32>
    %70 = vector.extract_strided_slice %63 {offsets = [1, 0], sizes = [18, 96], strides = [1, 1]} : vector<20x96xf32> to vector<18x96xf32>
    %c1_51 = arith.constant 1 : index
    %c0_52 = arith.constant 0 : index
    %c0_53 = arith.constant 0 : index
    %71 = vector.load %arg9[%c1_51, %c0_52, %c0_53] : memref<3x96x32xf32, #tpu.memory_space<vmem>>, vector<1x96x32xf32>
    %72 = vector.shape_cast %71 : vector<1x96x32xf32> to vector<96x32xf32>
    %cst_54 = arith.constant dense<0.000000e+00> : vector<18x32xf32>
    %73 = tpu.matmul %70, %72, %cst_54 {dimension_numbers = #tpu.dot_dimension_numbers<[1], [0], [0], [1], [0, 0, 1, 1], [], []>} : vector<18x96xf32>, vector<96x32xf32>, vector<18x32xf32> -> vector<18x32xf32>
    %74 = arith.addf %69, %73 : vector<18x32xf32>
    %75 = vector.extract_strided_slice %63 {offsets = [2, 0], sizes = [18, 96], strides = [1, 1]} : vector<20x96xf32> to vector<18x96xf32>
    %c2_55 = arith.constant 2 : index
    %c0_56 = arith.constant 0 : index
    %c0_57 = arith.constant 0 : index
    %76 = vector.load %arg9[%c2_55, %c0_56, %c0_57] : memref<3x96x32xf32, #tpu.memory_space<vmem>>, vector<1x96x32xf32>
    %77 = vector.shape_cast %76 : vector<1x96x32xf32> to vector<96x32xf32>
    %cst_58 = arith.constant dense<0.000000e+00> : vector<18x32xf32>
    %78 = tpu.matmul %75, %77, %cst_58 {dimension_numbers = #tpu.dot_dimension_numbers<[1], [0], [0], [1], [0, 0, 1, 1], [], []>} : vector<18x96xf32>, vector<96x32xf32>, vector<18x32xf32> -> vector<18x32xf32>
    %79 = arith.addf %74, %78 : vector<18x32xf32>
    %c0_59 = arith.constant 0 : index
    %c0_60 = arith.constant 0 : index
    %80 = vector.load %arg10[%c0_59, %c0_60] : memref<1x32xf32, #tpu.memory_space<vmem>>, vector<1x32xf32>
    %81 = vector.broadcast %80 : vector<1x32xf32> to vector<18x32xf32>
    %82 = arith.addf %79, %81 : vector<18x32xf32>
    %cst_61 = arith.constant 0.000000e+00 : f32
    %83 = vector.broadcast %cst_61 : f32 to vector<18x32xf32>
    %84 = arith.maximumf %82, %83 : vector<18x32xf32>
    %cst_62 = arith.constant 0.000000e+00 : f32
    %85 = vector.broadcast %cst_62 : f32 to vector<2x32xf32>
    %86 = vector.extract_strided_slice %84 {offsets = [0, 0], sizes = [1, 32], strides = [1, 1]} : vector<18x32xf32> to vector<1x32xf32>
    %87 = vector.extract_strided_slice %84 {offsets = [16, 0], sizes = [1, 32], strides = [1, 1]} : vector<18x32xf32> to vector<1x32xf32>
    %88 = tpu.concatenate %86, %87 in 0 : vector<1x32xf32>, vector<1x32xf32> -> vector<2x32xf32>
    %c0_63 = arith.constant 0 : index
    %c0_64 = arith.constant 0 : index
    %89 = vector.load %arg11[%c0_63, %c0_64] : memref<32x32xf32, #tpu.memory_space<vmem>>, vector<32x32xf32>
    %cst_65 = arith.constant dense<0.000000e+00> : vector<2x32xf32>
    %90 = tpu.matmul %88, %89, %cst_65 {dimension_numbers = #tpu.dot_dimension_numbers<[1], [0], [0], [1], [0, 0, 1, 1], [], []>} : vector<2x32xf32>, vector<32x32xf32>, vector<2x32xf32> -> vector<2x32xf32>
    %91 = arith.addf %85, %90 : vector<2x32xf32>
    %c0_66 = arith.constant 0 : index
    %c0_67 = arith.constant 0 : index
    %92 = vector.load %arg12[%c0_66, %c0_67] : memref<1x32xf32, #tpu.memory_space<vmem>>, vector<1x32xf32>
    %93 = vector.broadcast %92 : vector<1x32xf32> to vector<2x32xf32>
    %94 = arith.addf %91, %93 : vector<2x32xf32>
    %cst_68 = arith.constant dense<0.000000e+00> : vector<2xf32>
    %95 = vector.multi_reduction <add>, %94, %cst_68 [1] : vector<2x32xf32> to vector<2xf32>
    %96 = vector.shape_cast %95 : vector<2xf32> to vector<2x1xf32>
    %cst_69 = arith.constant 3.200000e+01 : f32
    %97 = vector.broadcast %cst_69 : f32 to vector<2x1xf32>
    %98 = arith.divf %96, %97 : vector<2x1xf32>
    %99 = vector.broadcast %98 : vector<2x1xf32> to vector<2x32xf32>
    %100 = arith.subf %94, %99 : vector<2x32xf32>
    %101 = arith.mulf %100, %100 : vector<2x32xf32>
    %cst_70 = arith.constant dense<0.000000e+00> : vector<2xf32>
    %102 = vector.multi_reduction <add>, %101, %cst_70 [1] : vector<2x32xf32> to vector<2xf32>
    %103 = vector.shape_cast %102 : vector<2xf32> to vector<2x1xf32>
    %cst_71 = arith.constant 3.200000e+01 : f32
    %104 = vector.broadcast %cst_71 : f32 to vector<2x1xf32>
    %105 = arith.divf %103, %104 : vector<2x1xf32>
    %106 = vector.broadcast %98 : vector<2x1xf32> to vector<2x32xf32>
    %107 = arith.subf %94, %106 : vector<2x32xf32>
    %cst_72 = arith.constant 9.99999974E-6 : f32
    %108 = vector.broadcast %cst_72 : f32 to vector<2x1xf32>
    %109 = arith.addf %105, %108 : vector<2x1xf32>
    %110 = math.rsqrt %109 : vector<2x1xf32>
    %111 = vector.broadcast %110 : vector<2x1xf32> to vector<2x32xf32>
    %112 = arith.mulf %107, %111 : vector<2x32xf32>
    %c0_73 = arith.constant 0 : index
    %c0_74 = arith.constant 0 : index
    %113 = vector.load %arg13[%c0_73, %c0_74] : memref<1x32xf32, #tpu.memory_space<vmem>>, vector<1x32xf32>
    %114 = vector.broadcast %113 : vector<1x32xf32> to vector<2x32xf32>
    %115 = arith.mulf %112, %114 : vector<2x32xf32>
    %c0_75 = arith.constant 0 : index
    %c0_76 = arith.constant 0 : index
    %116 = vector.load %arg14[%c0_75, %c0_76] : memref<1x32xf32, #tpu.memory_space<vmem>>, vector<1x32xf32>
    %117 = vector.broadcast %116 : vector<1x32xf32> to vector<2x32xf32>
    %118 = arith.addf %115, %117 : vector<2x32xf32>
    %119 = math.tanh %118 : vector<2x32xf32>
    %c0_77 = arith.constant 0 : index
    %c0_78 = arith.constant 0 : index
    %120 = vector.load %arg2[%c0_77, %c0_78] : memref<2x4xf32, #tpu.memory_space<vmem>>, vector<2x4xf32>
    %c0_79 = arith.constant 0 : index
    %c0_80 = arith.constant 0 : index
    %121 = vector.load %arg15[%c0_79, %c0_80] : memref<32x64xf32, #tpu.memory_space<vmem>>, vector<32x64xf32>
    %cst_81 = arith.constant dense<0.000000e+00> : vector<2x64xf32>
    %122 = tpu.matmul %119, %121, %cst_81 {dimension_numbers = #tpu.dot_dimension_numbers<[1], [0], [0], [1], [0, 0, 1, 1], [], []>} : vector<2x32xf32>, vector<32x64xf32>, vector<2x64xf32> -> vector<2x64xf32>
    %c0_82 = arith.constant 0 : index
    %c0_83 = arith.constant 0 : index
    %123 = vector.load %arg16[%c0_82, %c0_83] : memref<4x64xf32, #tpu.memory_space<vmem>>, vector<4x64xf32>
    %cst_84 = arith.constant dense<0.000000e+00> : vector<2x64xf32>
    %124 = tpu.matmul %120, %123, %cst_84 {dimension_numbers = #tpu.dot_dimension_numbers<[1], [0], [0], [1], [0, 0, 1, 1], [], []>} : vector<2x4xf32>, vector<4x64xf32>, vector<2x64xf32> -> vector<2x64xf32>
    %125 = arith.addf %122, %124 : vector<2x64xf32>
    %c0_85 = arith.constant 0 : index
    %c0_86 = arith.constant 0 : index
    %126 = vector.load %arg17[%c0_85, %c0_86] : memref<1x64xf32, #tpu.memory_space<vmem>>, vector<1x64xf32>
    %127 = vector.broadcast %126 : vector<1x64xf32> to vector<2x64xf32>
    %128 = arith.addf %125, %127 : vector<2x64xf32>
    %cst_87 = arith.constant 0.000000e+00 : f32
    %129 = vector.broadcast %cst_87 : f32 to vector<2x64xf32>
    %130 = arith.maximumf %128, %129 : vector<2x64xf32>
    %c0_88 = arith.constant 0 : index
    %c0_89 = arith.constant 0 : index
    %131 = vector.load %arg18[%c0_88, %c0_89] : memref<64x64xf32, #tpu.memory_space<vmem>>, vector<64x64xf32>
    %cst_90 = arith.constant dense<0.000000e+00> : vector<2x64xf32>
    %132 = tpu.matmul %130, %131, %cst_90 {dimension_numbers = #tpu.dot_dimension_numbers<[1], [0], [0], [1], [0, 0, 1, 1], [], []>} : vector<2x64xf32>, vector<64x64xf32>, vector<2x64xf32> -> vector<2x64xf32>
    %c0_91 = arith.constant 0 : index
    %c0_92 = arith.constant 0 : index
    %133 = vector.load %arg19[%c0_91, %c0_92] : memref<1x64xf32, #tpu.memory_space<vmem>>, vector<1x64xf32>
    %134 = vector.broadcast %133 : vector<1x64xf32> to vector<2x64xf32>
    %135 = arith.addf %132, %134 : vector<2x64xf32>
    %cst_93 = arith.constant 0.000000e+00 : f32
    %136 = vector.broadcast %cst_93 : f32 to vector<2x64xf32>
    %137 = arith.maximumf %135, %136 : vector<2x64xf32>
    %c0_94 = arith.constant 0 : index
    %c0_95 = arith.constant 0 : index
    %138 = vector.load %arg20[%c0_94, %c0_95] : memref<64x2xf32, #tpu.memory_space<vmem>>, vector<64x2xf32>
    %cst_96 = arith.constant dense<0.000000e+00> : vector<2x2xf32>
    %139 = tpu.matmul %137, %138, %cst_96 {dimension_numbers = #tpu.dot_dimension_numbers<[1], [0], [0], [1], [0, 0, 1, 1], [], []>} : vector<2x64xf32>, vector<64x2xf32>, vector<2x2xf32> -> vector<2x2xf32>
    %c0_97 = arith.constant 0 : index
    %c0_98 = arith.constant 0 : index
    %140 = vector.load %arg21[%c0_97, %c0_98] : memref<1x2xf32, #tpu.memory_space<vmem>>, vector<1x2xf32>
    %141 = vector.broadcast %140 : vector<1x2xf32> to vector<2x2xf32>
    %142 = arith.addf %139, %141 : vector<2x2xf32>
    %c0_99 = arith.constant 0 : index
    %c0_100 = arith.constant 0 : index
    %143 = vector.load %arg22[%c0_99, %c0_100] : memref<2x2xf32, #tpu.memory_space<vmem>>, vector<2x2xf32>
    tpu.vector_store %arg22[%c0_99, %c0_100], %142 {strides = array<i32>} : memref<2x2xf32, #tpu.memory_space<vmem>>, vector<2x2xf32>,
    return
  }
  func.func @transform_0(%arg0: i32) -> (i32, i32) {
    %c0_i32 = arith.constant 0 : i32
    %c0_i32_0 = arith.constant 0 : i32
    return %arg0, %c0_i32 : i32, i32
  }
  func.func @transform_1(%arg0: i32) -> (i32, i32) {
    %c0_i32 = arith.constant 0 : i32
    %c0_i32_0 = arith.constant 0 : i32
    return %arg0, %c0_i32 : i32, i32
  }
  func.func @transform_2(%arg0: i32) -> (i32, i32, i32) {
    %c0_i32 = arith.constant 0 : i32
    %c0_i32_0 = arith.constant 0 : i32
    %c0_i32_1 = arith.constant 0 : i32
    %c0_i32_2 = arith.constant 0 : i32
    return %c0_i32, %c0_i32_0, %c0_i32_1 : i32, i32, i32
  }
  func.func @transform_3(%arg0: i32) -> (i32, i32) {
    %c0_i32 = arith.constant 0 : i32
    %c0_i32_0 = arith.constant 0 : i32
    %c0_i32_1 = arith.constant 0 : i32
    return %c0_i32, %c0_i32_0 : i32, i32
  }
  func.func @transform_4(%arg0: i32) -> (i32, i32, i32) {
    %c0_i32 = arith.constant 0 : i32
    %c0_i32_0 = arith.constant 0 : i32
    %c0_i32_1 = arith.constant 0 : i32
    %c0_i32_2 = arith.constant 0 : i32
    return %c0_i32, %c0_i32_0, %c0_i32_1 : i32, i32, i32
  }
  func.func @transform_5(%arg0: i32) -> (i32, i32) {
    %c0_i32 = arith.constant 0 : i32
    %c0_i32_0 = arith.constant 0 : i32
    %c0_i32_1 = arith.constant 0 : i32
    return %c0_i32, %c0_i32_0 : i32, i32
  }
  func.func @transform_6(%arg0: i32) -> (i32, i32, i32) {
    %c0_i32 = arith.constant 0 : i32
    %c0_i32_0 = arith.constant 0 : i32
    %c0_i32_1 = arith.constant 0 : i32
    %c0_i32_2 = arith.constant 0 : i32
    return %c0_i32, %c0_i32_0, %c0_i32_1 : i32, i32, i32
  }
  func.func @transform_7(%arg0: i32) -> (i32, i32) {
    %c0_i32 = arith.constant 0 : i32
    %c0_i32_0 = arith.constant 0 : i32
    %c0_i32_1 = arith.constant 0 : i32
    return %c0_i32, %c0_i32_0 : i32, i32
  }
  func.func @transform_8(%arg0: i32) -> (i32, i32, i32) {
    %c0_i32 = arith.constant 0 : i32
    %c0_i32_0 = arith.constant 0 : i32
    %c0_i32_1 = arith.constant 0 : i32
    %c0_i32_2 = arith.constant 0 : i32
    return %c0_i32, %c0_i32_0, %c0_i32_1 : i32, i32, i32
  }
  func.func @transform_9(%arg0: i32) -> (i32, i32) {
    %c0_i32 = arith.constant 0 : i32
    %c0_i32_0 = arith.constant 0 : i32
    %c0_i32_1 = arith.constant 0 : i32
    return %c0_i32, %c0_i32_0 : i32, i32
  }
  func.func @transform_10(%arg0: i32) -> (i32, i32) {
    %c0_i32 = arith.constant 0 : i32
    %c0_i32_0 = arith.constant 0 : i32
    %c0_i32_1 = arith.constant 0 : i32
    return %c0_i32, %c0_i32_0 : i32, i32
  }
  func.func @transform_11(%arg0: i32) -> (i32, i32) {
    %c0_i32 = arith.constant 0 : i32
    %c0_i32_0 = arith.constant 0 : i32
    %c0_i32_1 = arith.constant 0 : i32
    return %c0_i32, %c0_i32_0 : i32, i32
  }
  func.func @transform_12(%arg0: i32) -> (i32, i32) {
    %c0_i32 = arith.constant 0 : i32
    %c0_i32_0 = arith.constant 0 : i32
    %c0_i32_1 = arith.constant 0 : i32
    return %c0_i32, %c0_i32_0 : i32, i32
  }
  func.func @transform_13(%arg0: i32) -> (i32, i32) {
    %c0_i32 = arith.constant 0 : i32
    %c0_i32_0 = arith.constant 0 : i32
    %c0_i32_1 = arith.constant 0 : i32
    return %c0_i32, %c0_i32_0 : i32, i32
  }
  func.func @transform_14(%arg0: i32) -> (i32, i32) {
    %c0_i32 = arith.constant 0 : i32
    %c0_i32_0 = arith.constant 0 : i32
    %c0_i32_1 = arith.constant 0 : i32
    return %c0_i32, %c0_i32_0 : i32, i32
  }
  func.func @transform_15(%arg0: i32) -> (i32, i32) {
    %c0_i32 = arith.constant 0 : i32
    %c0_i32_0 = arith.constant 0 : i32
    %c0_i32_1 = arith.constant 0 : i32
    return %c0_i32, %c0_i32_0 : i32, i32
  }
  func.func @transform_16(%arg0: i32) -> (i32, i32) {
    %c0_i32 = arith.constant 0 : i32
    %c0_i32_0 = arith.constant 0 : i32
    %c0_i32_1 = arith.constant 0 : i32
    return %c0_i32, %c0_i32_0 : i32, i32
  }
  func.func @transform_17(%arg0: i32) -> (i32, i32) {
    %c0_i32 = arith.constant 0 : i32
    %c0_i32_0 = arith.constant 0 : i32
    %c0_i32_1 = arith.constant 0 : i32
    return %c0_i32, %c0_i32_0 : i32, i32
  }
  func.func @transform_18(%arg0: i32) -> (i32, i32) {
    %c0_i32 = arith.constant 0 : i32
    %c0_i32_0 = arith.constant 0 : i32
    %c0_i32_1 = arith.constant 0 : i32
    return %c0_i32, %c0_i32_0 : i32, i32
  }
  func.func @transform_19(%arg0: i32) -> (i32, i32) {
    %c0_i32 = arith.constant 0 : i32
    %c0_i32_0 = arith.constant 0 : i32
    %c0_i32_1 = arith.constant 0 : i32
    return %c0_i32, %c0_i32_0 : i32, i32
  }
  func.func @transform_20(%arg0: i32) -> (i32, i32) {
    %c0_i32 = arith.constant 0 : i32
    %c0_i32_0 = arith.constant 0 : i32
    %c0_i32_1 = arith.constant 0 : i32
    return %c0_i32, %c0_i32_0 : i32, i32
  }
  func.func @transform_21(%arg0: i32) -> (i32, i32) {
    %c0_i32 = arith.constant 0 : i32
    %c0_i32_0 = arith.constant 0 : i32
    return %arg0, %c0_i32 : i32, i32
  }
}

</mosaic_0001>

<llo_original>
// kernel: tpu_custom_call.1
$region0: #{tpu_custom_call.1}
  #allocation0 [shape = 'u32[]', space=smem, size = 0x4, offset = 0x4, fixed_abs, tag = 'smem constant byte address 0x4 - core index']
  #allocation1 [shape = 'u32[72,128]{1,0:T(1,128)}', space=vmem, size = 0x9000, scoped, tag = 'internal scratch']
  %s0 = inlined_call_operand.vmem [shape: f32[32,64], index: 0, kind: input, shape index: {}]
  %s1 = inlined_call_operand.vmem [shape: f32[2,4], index: 1, kind: input, shape index: {}]
  %s2 = inlined_call_operand.vmem [shape: f32[3,64,224], index: 2, kind: input, shape index: {}]
  %s3 = inlined_call_operand.vmem [shape: f32[1,224], index: 3, kind: input, shape index: {}]
  %s4 = inlined_call_operand.vmem [shape: f32[3,224,160], index: 4, kind: input, shape index: {}]
  %s5 = inlined_call_operand.vmem [shape: f32[1,160], index: 5, kind: input, shape index: {}]
  %s6 = inlined_call_operand.vmem [shape: f32[3,160,96], index: 6, kind: input, shape index: {}]
  %s7 = inlined_call_operand.vmem [shape: f32[1,96], index: 7, kind: input, shape index: {}]
  %s8 = inlined_call_operand.vmem [shape: f32[3,96,32], index: 8, kind: input, shape index: {}]
  %s9 = inlined_call_operand.vmem [shape: f32[1,32], index: 9, kind: input, shape index: {}]
  %s10 = inlined_call_operand.vmem [shape: f32[32,32], index: 10, kind: input, shape index: {}]
  %s11 = inlined_call_operand.vmem [shape: f32[1,32], index: 11, kind: input, shape index: {}]
  %s12 = inlined_call_operand.vmem [shape: f32[1,32], index: 12, kind: input, shape index: {}]
  %s13 = inlined_call_operand.vmem [shape: f32[1,32], index: 13, kind: input, shape index: {}]
  %s14 = inlined_call_operand.vmem [shape: f32[32,64], index: 14, kind: input, shape index: {}]
  %s15 = inlined_call_operand.vmem [shape: f32[4,64], index: 15, kind: input, shape index: {}]
  %s16 = inlined_call_operand.vmem [shape: f32[1,64], index: 16, kind: input, shape index: {}]
  %s17 = inlined_call_operand.vmem [shape: f32[64,64], index: 17, kind: input, shape index: {}]
  %s18 = inlined_call_operand.vmem [shape: f32[1,64], index: 18, kind: input, shape index: {}]
  %s19 = inlined_call_operand.vmem [shape: f32[64,2], index: 19, kind: input, shape index: {}]
  %s20 = inlined_call_operand.vmem [shape: f32[1,2], index: 20, kind: input, shape index: {}]
  %s21 = inlined_call_operand.hbm [shape: f32[2,2], index: 21, kind: output, shape index: {}]
  %s22 = sld [smem:[#allocation0]]
  $region94: #{tpu_custom_call.1} parent=0
    _
  %s24 = ssub.s32 1, %s22
  %s25 = scalar_select 0, %s24, %s22
  $region1: #{tpu_custom_call.1} parent=0
    #allocation2 [shape = 'u8[1024]{0}', space=vmem, size = 0x400, scoped, tag = 'output window, operand 0, single buffered']
    #allocation3 [shape = 's32[1]{0}', space=sflag, size = 0x4, scoped, tag = 'scoped memory for tpu_custom_call.1']
    %26 = vsyncpa [#allocation3], 0
    // Predicated region
    $region2: #{tpu_custom_call.1} parent=1 // pred_check
      _
    $region3: #{tpu_custom_call.1} parent=1 // pred_check_branch
      %28 = sbr.rel (0) target = $region5
    $region4: #{tpu_custom_call.1} parent=1 // pred_region
      _
    $region5: #{tpu_custom_call.1} parent=1 // pred_fallthru
      _
    // Predicated region
    $region6: #{tpu_custom_call.1} parent=1 // pred_check
      _
    $region7: #{tpu_custom_call.1} parent=1 // pred_check_branch
      %30 = sbr.rel (0) target = $region9
    $region8: #{tpu_custom_call.1} parent=1 // pred_region
      _
    $region9: #{tpu_custom_call.1} parent=1 // pred_fallthru
      _
    // Predicated region
    $region10: #{tpu_custom_call.1} parent=1 // pred_check
      _
    $region11: #{tpu_custom_call.1} parent=1 // pred_check_branch
      %32 = sbr.rel (0) target = $region13
    $region12: #{tpu_custom_call.1} parent=1 // pred_region
      _
    $region13: #{tpu_custom_call.1} parent=1 // pred_fallthru
      _
    // Predicated region
    $region14: #{tpu_custom_call.1} parent=1 // pred_check
      _
    $region15: #{tpu_custom_call.1} parent=1 // pred_check_branch
      %34 = sbr.rel (0) target = $region17
    $region16: #{tpu_custom_call.1} parent=1 // pred_region
      _
    $region17: #{tpu_custom_call.1} parent=1 // pred_fallthru
      _
    // Predicated region
    $region18: #{tpu_custom_call.1} parent=1 // pred_check
      _
    $region19: #{tpu_custom_call.1} parent=1 // pred_check_branch
      %36 = sbr.rel (0) target = $region21
    $region20: #{tpu_custom_call.1} parent=1 // pred_region
      _
    $region21: #{tpu_custom_call.1} parent=1 // pred_fallthru
      _
    // Predicated region
    $region22: #{tpu_custom_call.1} parent=1 // pred_check
      _
    $region23: #{tpu_custom_call.1} parent=1 // pred_check_branch
      %38 = sbr.rel (0) target = $region25
    $region24: #{tpu_custom_call.1} parent=1 // pred_region
      _
    $region25: #{tpu_custom_call.1} parent=1 // pred_fallthru
      _
    // Predicated region
    $region26: #{tpu_custom_call.1} parent=1 // pred_check
      _
    $region27: #{tpu_custom_call.1} parent=1 // pred_check_branch
      %40 = sbr.rel (0) target = $region29
    $region28: #{tpu_custom_call.1} parent=1 // pred_region
      _
    $region29: #{tpu_custom_call.1} parent=1 // pred_fallthru
      _
    // Predicated region
    $region30: #{tpu_custom_call.1} parent=1 // pred_check
      _
    $region31: #{tpu_custom_call.1} parent=1 // pred_check_branch
      %42 = sbr.rel (0) target = $region33
    $region32: #{tpu_custom_call.1} parent=1 // pred_region
      _
    $region33: #{tpu_custom_call.1} parent=1 // pred_fallthru
      _
    // Predicated region
    $region34: #{tpu_custom_call.1} parent=1 // pred_check
      _
    $region35: #{tpu_custom_call.1} parent=1 // pred_check_branch
      %44 = sbr.rel (0) target = $region37
    $region36: #{tpu_custom_call.1} parent=1 // pred_region
      _
    $region37: #{tpu_custom_call.1} parent=1 // pred_fallthru
      _
    // Predicated region
    $region38: #{tpu_custom_call.1} parent=1 // pred_check
      _
    $region39: #{tpu_custom_call.1} parent=1 // pred_check_branch
      %46 = sbr.rel (0) target = $region41
    $region40: #{tpu_custom_call.1} parent=1 // pred_region
      _
    $region41: #{tpu_custom_call.1} parent=1 // pred_fallthru
      _
    // Predicated region
    $region42: #{tpu_custom_call.1} parent=1 // pred_check
      _
    $region43: #{tpu_custom_call.1} parent=1 // pred_check_branch
      %48 = sbr.rel (0) target = $region45
    $region44: #{tpu_custom_call.1} parent=1 // pred_region
      _
    $region45: #{tpu_custom_call.1} parent=1 // pred_fallthru
      _
    // Predicated region
    $region46: #{tpu_custom_call.1} parent=1 // pred_check
      _
    $region47: #{tpu_custom_call.1} parent=1 // pred_check_branch
      %50 = sbr.rel (0) target = $region49
    $region48: #{tpu_custom_call.1} parent=1 // pred_region
      _
    $region49: #{tpu_custom_call.1} parent=1 // pred_fallthru
      _
    // Predicated region
    $region50: #{tpu_custom_call.1} parent=1 // pred_check
      _
    $region51: #{tpu_custom_call.1} parent=1 // pred_check_branch
      %52 = sbr.rel (0) target = $region53
    $region52: #{tpu_custom_call.1} parent=1 // pred_region
      _
    $region53: #{tpu_custom_call.1} parent=1 // pred_fallthru
      _
    // Predicated region
    $region54: #{tpu_custom_call.1} parent=1 // pred_check
      _
    $region55: #{tpu_custom_call.1} parent=1 // pred_check_branch
      %54 = sbr.rel (0) target = $region57
    $region56: #{tpu_custom_call.1} parent=1 // pred_region
      _
    $region57: #{tpu_custom_call.1} parent=1 // pred_fallthru
      _
    // Predicated region
    $region58: #{tpu_custom_call.1} parent=1 // pred_check
      _
    $region59: #{tpu_custom_call.1} parent=1 // pred_check_branch
      %56 = sbr.rel (0) target = $region61
    $region60: #{tpu_custom_call.1} parent=1 // pred_region
      _
    $region61: #{tpu_custom_call.1} parent=1 // pred_fallthru
      _
    // Predicated region
    $region62: #{tpu_custom_call.1} parent=1 // pred_check
      _
    $region63: #{tpu_custom_call.1} parent=1 // pred_check_branch
      %58 = sbr.rel (0) target = $region65
    $region64: #{tpu_custom_call.1} parent=1 // pred_region
      _
    $region65: #{tpu_custom_call.1} parent=1 // pred_fallthru
      _
    // Predicated region
    $region66: #{tpu_custom_call.1} parent=1 // pred_check
      _
    $region67: #{tpu_custom_call.1} parent=1 // pred_check_branch
      %60 = sbr.rel (0) target = $region69
    $region68: #{tpu_custom_call.1} parent=1 // pred_region
      _
    $region69: #{tpu_custom_call.1} parent=1 // pred_fallthru
      _
    // Predicated region
    $region70: #{tpu_custom_call.1} parent=1 // pred_check
      _
    $region71: #{tpu_custom_call.1} parent=1 // pred_check_branch
      %62 = sbr.rel (0) target = $region73
    $region72: #{tpu_custom_call.1} parent=1 // pred_region
      _
    $region73: #{tpu_custom_call.1} parent=1 // pred_fallthru
      _
    // Predicated region
    $region74: #{tpu_custom_call.1} parent=1 // pred_check
      _
    $region75: #{tpu_custom_call.1} parent=1 // pred_check_branch
      %64 = sbr.rel (0) target = $region77
    $region76: #{tpu_custom_call.1} parent=1 // pred_region
      _
    $region77: #{tpu_custom_call.1} parent=1 // pred_fallthru
      _
    // Predicated region
    $region78: #{tpu_custom_call.1} parent=1 // pred_check
      _
    $region79: #{tpu_custom_call.1} parent=1 // pred_check_branch
      %66 = sbr.rel (0) target = $region81
    $region80: #{tpu_custom_call.1} parent=1 // pred_region
      _
    $region81: #{tpu_custom_call.1} parent=1 // pred_fallthru
      _
    // Predicated region
    $region82: #{tpu_custom_call.1} parent=1 // pred_check
      _
    $region83: #{tpu_custom_call.1} parent=1 // pred_check_branch
      %68 = sbr.rel (0) target = $region85
    $region84: #{tpu_custom_call.1} parent=1 // pred_region
      _
    $region85: #{tpu_custom_call.1} parent=1 // pred_fallthru
      _
    %v69 = vld [vmem:[%s0] sm:$0xff]
    %v70 = vld [vmem:[%s0 + $0x8] sm:$0xff]
    %v71 = vld [vmem:[%s0 + $0x10] sm:$0xff]
    %v72 = vld [vmem:[%s0 + $0x18] sm:$0xff]
    %v73 = vld [vmem:[%s2] sm:$0xff]
    %v74 = vld [vmem:[%s2 + $0x8] sm:$0xff]
    %v75 = vld [vmem:[%s2 + $0x10] sm:$0xff]
    %v76 = vld [vmem:[%s2 + $0x18] sm:$0xff]
    %v77 = vld [vmem:[%s2 + $0x20] sm:$0xff]
    %v78 = vld [vmem:[%s2 + $0x28] sm:$0xff]
    %v79 = vld [vmem:[%s2 + $0x30] sm:$0xff]
    %v80 = vld [vmem:[%s2 + $0x38] sm:$0xff]
    %v81 = vld [vmem:[%s2 + $0x40] sm:$0xff]
    %v82 = vld [vmem:[%s2 + $0x48] sm:$0xff]
    %v83 = vld [vmem:[%s2 + $0x50] sm:$0xff]
    %v84 = vld [vmem:[%s2 + $0x58] sm:$0xff]
    %v85 = vld [vmem:[%s2 + $0x60] sm:$0xff]
    %v86 = vld [vmem:[%s2 + $0x68] sm:$0xff]
    %v87 = vld [vmem:[%s2 + $0x70] sm:$0xff]
    %v88 = vld [vmem:[%s2 + $0x78] sm:$0xff]
    %s89 = scalar_lea.vmem %s2, 128
    %v90 = vld [vmem:[%s89] sm:$0xff]
    %v91 = vld [vmem:[%s89 + $0x8] sm:$0xff]
    %v92 = vld [vmem:[%s89 + $0x10] sm:$0xff]
    %v93 = vld [vmem:[%s89 + $0x18] sm:$0xff]
    %v94 = vld [vmem:[%s89 + $0x20] sm:$0xff]
    %v95 = vld [vmem:[%s89 + $0x28] sm:$0xff]
    %v96 = vld [vmem:[%s89 + $0x30] sm:$0xff]
    %v97 = vld [vmem:[%s89 + $0x38] sm:$0xff]
    %v98 = vld [vmem:[%s89 + $0x40] sm:$0xff]
    %v99 = vld [vmem:[%s89 + $0x48] sm:$0xff]
    %v100 = vld [vmem:[%s89 + $0x50] sm:$0xff]
    %v101 = vld [vmem:[%s89 + $0x58] sm:$0xff]
    %v102 = vld [vmem:[%s89 + $0x60] sm:$0xff]
    %v103 = vld [vmem:[%s89 + $0x68] sm:$0xff]
    %v104 = vld [vmem:[%s89 + $0x70] sm:$0xff]
    %v105 = vld [vmem:[%s89 + $0x78] sm:$0xff]
    %vm106 = vcmask 523264
    %v108 = vsel %vm106, %v70, 0
    %v111 = vsel %vm106, %v71, 0
    %v114 = vsel %vm106, %v72, 0
    %116 = vmatpush.msra.mxu0 0.0
    %117 = vmatpush.msra.mxu0 0.0
    %118 = vmatpush.msra.mxu0 0.0
    %119 = vmatpush.msra.mxu0 0.0
    %120 = vmatpush.msra.mxu0 0.0
    %121 = vmatpush.msra.mxu0 0.0
    %122 = vmatpush.msra.mxu0 0.0
    %123 = vmatpush.msra.mxu0 0.0
    %124 = vmatpush.msra.mxu0 %v104
    %125 = vmatpush.msra.mxu0 %v102
    %126 = vmatpush.msra.mxu0 %v100
    %127 = vmatpush.msra.mxu0 %v98
    %128 = vmatpush.msra.mxu0 %v96
    %129 = vmatpush.msra.mxu0 %v94
    %130 = vmatpush.msra.mxu0 %v92
    %131 = vmatpush.msra.mxu0 %v90
    %132 = vmatmul.f32.gmra.mxu0 %v108
    %v133 = vpop.f32.mrf.mxu0
    %v134 = vadd.f32 0.0, %v133
    %135 = vmatmul.f32.gmra.mxu0 %v111
    %v136 = vpop.f32.mrf.mxu0
    %v137 = vadd.f32 0.0, %v136
    %138 = vmatmul.f32.gmra.mxu0 %v114
    %v139 = vpop.f32.mrf.mxu0
    %v140 = vadd.f32 0.0, %v139
    %141 = vdwg.mxu0
    %142 = vmatpush.msra.mxu0 0.0
    %143 = vmatpush.msra.mxu0 0.0
    %144 = vmatpush.msra.mxu0 0.0
    %145 = vmatpush.msra.mxu0 0.0
    %146 = vmatpush.msra.mxu0 0.0
    %147 = vmatpush.msra.mxu0 0.0
    %148 = vmatpush.msra.mxu0 0.0
    %149 = vmatpush.msra.mxu0 0.0
    %150 = vmatpush.msra.mxu0 %v105
    %151 = vmatpush.msra.mxu0 %v103
    %152 = vmatpush.msra.mxu0 %v101
    %153 = vmatpush.msra.mxu0 %v99
    %154 = vmatpush.msra.mxu0 %v97
    %155 = vmatpush.msra.mxu0 %v95
    %156 = vmatpush.msra.mxu0 %v93
    %157 = vmatpush.msra.mxu0 %v91
    %158 = vmatmul.f32.gmra.mxu0 %v108
    %v159 = vpop.f32.mrf.mxu0
    %v160 = vadd.f32 0.0, %v159
    %161 = vmatmul.f32.gmra.mxu0 %v111
    %v162 = vpop.f32.mrf.mxu0
    %v163 = vadd.f32 0.0, %v162
    %164 = vmatmul.f32.gmra.mxu0 %v114
    %v165 = vpop.f32.mrf.mxu0
    %v166 = vadd.f32 0.0, %v165
    %167 = vdwg.mxu0
    %v169 = vsel %vm106, %v69, 0
    %171 = vmatpush.msra.mxu0 0.0
    %172 = vmatpush.msra.mxu0 0.0
    %173 = vmatpush.msra.mxu0 0.0
    %174 = vmatpush.msra.mxu0 0.0
    %175 = vmatpush.msra.mxu0 0.0
    %176 = vmatpush.msra.mxu0 0.0
    %177 = vmatpush.msra.mxu0 0.0
    %178 = vmatpush.msra.mxu0 0.0
    %179 = vmatpush.msra.mxu0 %v87
    %180 = vmatpush.msra.mxu0 %v85
    %181 = vmatpush.msra.mxu0 %v83
    %182 = vmatpush.msra.mxu0 %v81
    %183 = vmatpush.msra.mxu0 %v79
    %184 = vmatpush.msra.mxu0 %v77
    %185 = vmatpush.msra.mxu0 %v75
    %186 = vmatpush.msra.mxu0 %v73
    %187 = vmatmul.f32.gmra.mxu0 %v169
    %v188 = vpop.f32.mrf.mxu0
    %v189 = vadd.f32 %v134, %v188
    %190 = vmatmul.f32.gmra.mxu0 %v108
    %v191 = vpop.f32.mrf.mxu0
    %v192 = vadd.f32 %v137, %v191
    %193 = vmatmul.f32.gmra.mxu0 %v111
    %v194 = vpop.f32.mrf.mxu0
    %v195 = vadd.f32 %v140, %v194
    %196 = vdwg.mxu0
    %197 = vmatpush.msra.mxu0 0.0
    %198 = vmatpush.msra.mxu0 0.0
    %199 = vmatpush.msra.mxu0 0.0
    %200 = vmatpush.msra.mxu0 0.0
    %201 = vmatpush.msra.mxu0 0.0
    %202 = vmatpush.msra.mxu0 0.0
    %203 = vmatpush.msra.mxu0 0.0
    %204 = vmatpush.msra.mxu0 0.0
    %205 = vmatpush.msra.mxu0 %v88
    %206 = vmatpush.msra.mxu0 %v86
    %207 = vmatpush.msra.mxu0 %v84
    %208 = vmatpush.msra.mxu0 %v82
    %209 = vmatpush.msra.mxu0 %v80
    %210 = vmatpush.msra.mxu0 %v78
    %211 = vmatpush.msra.mxu0 %v76
    %212 = vmatpush.msra.mxu0 %v74
    %213 = vmatmul.f32.gmra.mxu0 %v169
    %v214 = vpop.f32.mrf.mxu0
    %v215 = vadd.f32 %v160, %v214
    %216 = vmatmul.f32.gmra.mxu0 %v108
    %v217 = vpop.f32.mrf.mxu0
    %v218 = vadd.f32 %v163, %v217
    %219 = vmatmul.f32.gmra.mxu0 %v111
    %v220 = vpop.f32.mrf.mxu0
    %v221 = vadd.f32 %v166, %v220
    %222 = vdwg.mxu0
    %s223 = scalar_lea.vmem %s2, 256
    %v224 = vld [vmem:[%s223] sm:$0xff]
    %v225 = vld [vmem:[%s223 + $0x8] sm:$0xff]
    %v226 = vld [vmem:[%s223 + $0x10] sm:$0xff]
    %v227 = vld [vmem:[%s223 + $0x18] sm:$0xff]
    %v228 = vld [vmem:[%s223 + $0x20] sm:$0xff]
    %v229 = vld [vmem:[%s223 + $0x28] sm:$0xff]
    %v230 = vld [vmem:[%s223 + $0x30] sm:$0xff]
    %v231 = vld [vmem:[%s223 + $0x38] sm:$0xff]
    %v232 = vld [vmem:[%s223 + $0x40] sm:$0xff]
    %v233 = vld [vmem:[%s223 + $0x48] sm:$0xff]
    %v234 = vld [vmem:[%s223 + $0x50] sm:$0xff]
    %v235 = vld [vmem:[%s223 + $0x58] sm:$0xff]
    %v236 = vld [vmem:[%s223 + $0x60] sm:$0xff]
    %v237 = vld [vmem:[%s223 + $0x68] sm:$0xff]
    %v238 = vld [vmem:[%s223 + $0x70] sm:$0xff]
    %v239 = vld [vmem:[%s223 + $0x78] sm:$0xff]
    %vm240 = vcmask 1046528
    %v241 = vrot.slane %v69, 1
    %v242 = vrot.slane %v70, 1
    %v243 = vsel %vm240, %v241, %v242
    %v244 = vrot.slane %v71, 1
    %v245 = vsel %vm240, %v242, %v244
    %v246 = vrot.slane %v72, 1
    %v247 = vsel %vm240, %v244, %v246
    %v248 = vsel %vm106, %v243, 0
    %v250 = vsel %vm106, %v245, 0
    %v252 = vsel %vm106, %v247, 0
    %254 = vmatpush.msra.mxu0 0.0
    %255 = vmatpush.msra.mxu0 0.0
    %256 = vmatpush.msra.mxu0 0.0
    %257 = vmatpush.msra.mxu0 0.0
    %258 = vmatpush.msra.mxu0 0.0
    %259 = vmatpush.msra.mxu0 0.0
    %260 = vmatpush.msra.mxu0 0.0
    %261 = vmatpush.msra.mxu0 0.0
    %262 = vmatpush.msra.mxu0 %v238
    %263 = vmatpush.msra.mxu0 %v236
    %264 = vmatpush.msra.mxu0 %v234
    %265 = vmatpush.msra.mxu0 %v232
    %266 = vmatpush.msra.mxu0 %v230
    %267 = vmatpush.msra.mxu0 %v228
    %268 = vmatpush.msra.mxu0 %v226
    %269 = vmatpush.msra.mxu0 %v224
    %270 = vmatmul.f32.gmra.mxu0 %v248
    %v271 = vpop.f32.mrf.mxu0
    %v272 = vadd.f32 0.0, %v271
    %273 = vmatmul.f32.gmra.mxu0 %v250
    %v274 = vpop.f32.mrf.mxu0
    %v275 = vadd.f32 0.0, %v274
    %276 = vmatmul.f32.gmra.mxu0 %v252
    %v277 = vpop.f32.mrf.mxu0
    %v278 = vadd.f32 0.0, %v277
    %279 = vdwg.mxu0
    %280 = vmatpush.msra.mxu0 0.0
    %281 = vmatpush.msra.mxu0 0.0
    %282 = vmatpush.msra.mxu0 0.0
    %283 = vmatpush.msra.mxu0 0.0
    %284 = vmatpush.msra.mxu0 0.0
    %285 = vmatpush.msra.mxu0 0.0
    %286 = vmatpush.msra.mxu0 0.0
    %287 = vmatpush.msra.mxu0 0.0
    %288 = vmatpush.msra.mxu0 %v239
    %289 = vmatpush.msra.mxu0 %v237
    %290 = vmatpush.msra.mxu0 %v235
    %291 = vmatpush.msra.mxu0 %v233
    %292 = vmatpush.msra.mxu0 %v231
    %293 = vmatpush.msra.mxu0 %v229
    %294 = vmatpush.msra.mxu0 %v227
    %295 = vmatpush.msra.mxu0 %v225
    %296 = vmatmul.f32.gmra.mxu0 %v248
    %v297 = vpop.f32.mrf.mxu0
    %v298 = vadd.f32 0.0, %v297
    %299 = vmatmul.f32.gmra.mxu0 %v250
    %v300 = vpop.f32.mrf.mxu0
    %v301 = vadd.f32 0.0, %v300
    %302 = vmatmul.f32.gmra.mxu0 %v252
    %v303 = vpop.f32.mrf.mxu0
    %v304 = vadd.f32 0.0, %v303
    %305 = vdwg.mxu0
    %v306 = vadd.f32 %v189, %v272
    %v307 = vadd.f32 %v215, %v298
    %v308 = vadd.f32 %v192, %v275
    %v309 = vadd.f32 %v218, %v301
    %v310 = vadd.f32 %v195, %v278
    %v311 = vadd.f32 %v221, %v304
    %v312 = vld [vmem:[%s3] sm:$0x3]
    %v314 = vperm.slane %v312, 0
    %v315 = vperm.slane %v312, 1
    %v318 = vadd.f32 %v306, %v314
    %v319 = vadd.f32 %v307, %v315
    %v320 = vadd.f32 %v308, %v314
    %v321 = vadd.f32 %v309, %v315
    %v322 = vadd.f32 %v310, %v314
    %v323 = vadd.f32 %v311, %v315
    %v324 = vmax.f32 %v318, 0.0
    %v325 = vmax.f32 %v319, 0.0
    %v326 = vmax.f32 %v320, 0.0
    %v327 = vmax.f32 %v321, 0.0
    %v328 = vmax.f32 %v322, 0.0
    %v329 = vmax.f32 %v323, 0.0
    %v330 = vld [vmem:[%s4] sm:$0xff]
    %v331 = vld [vmem:[%s4 + $0x8] sm:$0xff]
    %v332 = vld [vmem:[%s4 + $0x10] sm:$0xff]
    %v333 = vld [vmem:[%s4 + $0x18] sm:$0xff]
    %v334 = vld [vmem:[%s4 + $0x20] sm:$0xff]
    %v335 = vld [vmem:[%s4 + $0x28] sm:$0xff]
    %v336 = vld [vmem:[%s4 + $0x30] sm:$0xff]
    %v337 = vld [vmem:[%s4 + $0x38] sm:$0xff]
    %v338 = vld [vmem:[%s4 + $0x40] sm:$0xff]
    %v339 = vld [vmem:[%s4 + $0x48] sm:$0xff]
    %v340 = vld [vmem:[%s4 + $0x50] sm:$0xff]
    %v341 = vld [vmem:[%s4 + $0x58] sm:$0xff]
    %v342 = vld [vmem:[%s4 + $0x60] sm:$0xff]
    %v343 = vld [vmem:[%s4 + $0x68] sm:$0xff]
    %v344 = vld [vmem:[%s4 + $0x70] sm:$0xff]
    %v345 = vld [vmem:[%s4 + $0x78] sm:$0xff]
    %v346 = vld [vmem:[%s4 + $0x80] sm:$0xff]
    %v347 = vld [vmem:[%s4 + $0x88] sm:$0xff]
    %v348 = vld [vmem:[%s4 + $0x90] sm:$0xff]
    %v349 = vld [vmem:[%s4 + $0x98] sm:$0xff]
    %v350 = vld [vmem:[%s4 + $0xa0] sm:$0xff]
    %v351 = vld [vmem:[%s4 + $0xa8] sm:$0xff]
    %v352 = vld [vmem:[%s4 + $0xb0] sm:$0xff]
    %v353 = vld [vmem:[%s4 + $0xb8] sm:$0xff]
    %v354 = vld [vmem:[%s4 + $0xc0] sm:$0xff]
    %v355 = vld [vmem:[%s4 + $0xc8] sm:$0xff]
    %v356 = vld [vmem:[%s4 + $0xd0] sm:$0xff]
    %v357 = vld [vmem:[%s4 + $0xd8] sm:$0xff]
    %v358 = vld [vmem:[%s4 + $0xe0] sm:$0xff]
    %v359 = vld [vmem:[%s4 + $0xe8] sm:$0xff]
    %v360 = vld [vmem:[%s4 + $0xf0] sm:$0xff]
    %v361 = vld [vmem:[%s4 + $0xf8] sm:$0xff]
    %v362 = vld [vmem:[%s4 + $0x100] sm:$0xff]
    %v363 = vld [vmem:[%s4 + $0x108] sm:$0xff]
    %v364 = vld [vmem:[%s4 + $0x110] sm:$0xff]
    %v365 = vld [vmem:[%s4 + $0x118] sm:$0xff]
    %v366 = vld [vmem:[%s4 + $0x120] sm:$0xff]
    %v367 = vld [vmem:[%s4 + $0x128] sm:$0xff]
    %v368 = vld [vmem:[%s4 + $0x130] sm:$0xff]
    %v369 = vld [vmem:[%s4 + $0x138] sm:$0xff]
    %v370 = vld [vmem:[%s4 + $0x140] sm:$0xff]
    %v371 = vld [vmem:[%s4 + $0x148] sm:$0xff]
    %v372 = vld [vmem:[%s4 + $0x150] sm:$0xff]
    %v373 = vld [vmem:[%s4 + $0x158] sm:$0xff]
    %v374 = vld [vmem:[%s4 + $0x160] sm:$0xff]
    %v375 = vld [vmem:[%s4 + $0x168] sm:$0xff]
    %v376 = vld [vmem:[%s4 + $0x170] sm:$0xff]
    %v377 = vld [vmem:[%s4 + $0x178] sm:$0xff]
    %v378 = vld [vmem:[%s4 + $0x180] sm:$0xff]
    %v379 = vld [vmem:[%s4 + $0x188] sm:$0xff]
    %v380 = vld [vmem:[%s4 + $0x190] sm:$0xff]
    %v381 = vld [vmem:[%s4 + $0x198] sm:$0xff]
    %v382 = vld [vmem:[%s4 + $0x1a0] sm:$0xff]
    %v383 = vld [vmem:[%s4 + $0x1a8] sm:$0xff]
    %v384 = vld [vmem:[%s4 + $0x1b0] sm:$0xff]
    %v385 = vld [vmem:[%s4 + $0x1b8] sm:$0xff]
    %s386 = scalar_lea.vmem %s4, 448
    %v387 = vld [vmem:[%s386] sm:$0xff]
    %v388 = vld [vmem:[%s386 + $0x8] sm:$0xff]
    %v389 = vld [vmem:[%s386 + $0x10] sm:$0xff]
    %v390 = vld [vmem:[%s386 + $0x18] sm:$0xff]
    %v391 = vld [vmem:[%s386 + $0x20] sm:$0xff]
    %v392 = vld [vmem:[%s386 + $0x28] sm:$0xff]
    %v393 = vld [vmem:[%s386 + $0x30] sm:$0xff]
    %v394 = vld [vmem:[%s386 + $0x38] sm:$0xff]
    %v395 = vld [vmem:[%s386 + $0x40] sm:$0xff]
    %v396 = vld [vmem:[%s386 + $0x48] sm:$0xff]
    %v397 = vld [vmem:[%s386 + $0x50] sm:$0xff]
    %v398 = vld [vmem:[%s386 + $0x58] sm:$0xff]
    %v399 = vld [vmem:[%s386 + $0x60] sm:$0xff]
    %v400 = vld [vmem:[%s386 + $0x68] sm:$0xff]
    %v401 = vld [vmem:[%s386 + $0x70] sm:$0xff]
    %v402 = vld [vmem:[%s386 + $0x78] sm:$0xff]
    %v403 = vld [vmem:[%s386 + $0x80] sm:$0xff]
    %v404 = vld [vmem:[%s386 + $0x88] sm:$0xff]
    %v405 = vld [vmem:[%s386 + $0x90] sm:$0xff]
    %v406 = vld [vmem:[%s386 + $0x98] sm:$0xff]
    %v407 = vld [vmem:[%s386 + $0xa0] sm:$0xff]
    %v408 = vld [vmem:[%s386 + $0xa8] sm:$0xff]
    %v409 = vld [vmem:[%s386 + $0xb0] sm:$0xff]
    %v410 = vld [vmem:[%s386 + $0xb8] sm:$0xff]
    %v411 = vld [vmem:[%s386 + $0xc0] sm:$0xff]
    %v412 = vld [vmem:[%s386 + $0xc8] sm:$0xff]
    %v413 = vld [vmem:[%s386 + $0xd0] sm:$0xff]
    %v414 = vld [vmem:[%s386 + $0xd8] sm:$0xff]
    %v415 = vld [vmem:[%s386 + $0xe0] sm:$0xff]
    %v416 = vld [vmem:[%s386 + $0xe8] sm:$0xff]
    %v417 = vld [vmem:[%s386 + $0xf0] sm:$0xff]
    %v418 = vld [vmem:[%s386 + $0xf8] sm:$0xff]
    %v419 = vld [vmem:[%s386 + $0x100] sm:$0xff]
    %v420 = vld [vmem:[%s386 + $0x108] sm:$0xff]
    %v421 = vld [vmem:[%s386 + $0x110] sm:$0xff]
    %v422 = vld [vmem:[%s386 + $0x118] sm:$0xff]
    %v423 = vld [vmem:[%s386 + $0x120] sm:$0xff]
    %v424 = vld [vmem:[%s386 + $0x128] sm:$0xff]
    %v425 = vld [vmem:[%s386 + $0x130] sm:$0xff]
    %v426 = vld [vmem:[%s386 + $0x138] sm:$0xff]
    %v427 = vld [vmem:[%s386 + $0x140] sm:$0xff]
    %v428 = vld [vmem:[%s386 + $0x148] sm:$0xff]
    %v429 = vld [vmem:[%s386 + $0x150] sm:$0xff]
    %v430 = vld [vmem:[%s386 + $0x158] sm:$0xff]
    %v431 = vld [vmem:[%s386 + $0x160] sm:$0xff]
    %v432 = vld [vmem:[%s386 + $0x168] sm:$0xff]
    %v433 = vld [vmem:[%s386 + $0x170] sm:$0xff]
    %v434 = vld [vmem:[%s386 + $0x178] sm:$0xff]
    %v435 = vld [vmem:[%s386 + $0x180] sm:$0xff]
    %v436 = vld [vmem:[%s386 + $0x188] sm:$0xff]
    %v437 = vld [vmem:[%s386 + $0x190] sm:$0xff]
    %v438 = vld [vmem:[%s386 + $0x198] sm:$0xff]
    %v439 = vld [vmem:[%s386 + $0x1a0] sm:$0xff]
    %v440 = vld [vmem:[%s386 + $0x1a8] sm:$0xff]
    %v441 = vld [vmem:[%s386 + $0x1b0] sm:$0xff]
    %v442 = vld [vmem:[%s386 + $0x1b8] sm:$0xff]
    %v449 = vrot.slane %v324, 1
    %v450 = vrot.slane %v326, 1
    %v451 = vsel %vm240, %v449, %v450
    %v452 = vrot.slane %v325, 1
    %v453 = vrot.slane %v327, 1
    %v454 = vsel %vm240, %v452, %v453
    %v455 = vrot.slane %v328, 1
    %v456 = vsel %vm240, %v450, %v455
    %v457 = vrot.slane %v329, 1
    %v458 = vsel %vm240, %v453, %v457
    %vm462 = vcmask 785408
    %v463 = vsel %vm462, %v454, 0
    %v465 = vsel %vm462, %v458, 0
    %v467 = vsel %vm462, %v457, 0
    %469 = vmatpush.msra.mxu0 %v417
    %470 = vmatpush.msra.mxu0 %v415
    %471 = vmatpush.msra.mxu0 %v413
    %472 = vmatpush.msra.mxu0 %v411
    %473 = vmatpush.msra.mxu0 %v409
    %474 = vmatpush.msra.mxu0 %v407
    %475 = vmatpush.msra.mxu0 %v405
    %476 = vmatpush.msra.mxu0 %v403
    %477 = vmatpush.msra.mxu0 %v401
    %478 = vmatpush.msra.mxu0 %v399
    %479 = vmatpush.msra.mxu0 %v397
    %480 = vmatpush.msra.mxu0 %v395
    %481 = vmatpush.msra.mxu0 %v393
    %482 = vmatpush.msra.mxu0 %v391
    %483 = vmatpush.msra.mxu0 %v389
    %484 = vmatpush.msra.mxu0 %v387
    %485 = vmatmul.f32.gmra.mxu0 %v451
    %v486 = vpop.f32.mrf.mxu0
    %v487 = vadd.f32 0.0, %v486
    %488 = vmatmul.f32.gmra.mxu0 %v456
    %v489 = vpop.f32.mrf.mxu0
    %v490 = vadd.f32 0.0, %v489
    %491 = vmatmul.f32.gmra.mxu0 %v455
    %v492 = vpop.f32.mrf.mxu0
    %v493 = vadd.f32 0.0, %v492
    %494 = vdwg.mxu0
    %495 = vmatpush.msra.mxu0 0.0
    %496 = vmatpush.msra.mxu0 0.0
    %497 = vmatpush.msra.mxu0 0.0
    %498 = vmatpush.msra.mxu0 0.0
    %499 = vmatpush.msra.mxu0 %v441
    %500 = vmatpush.msra.mxu0 %v439
    %501 = vmatpush.msra.mxu0 %v437
    %502 = vmatpush.msra.mxu0 %v435
    %503 = vmatpush.msra.mxu0 %v433
    %504 = vmatpush.msra.mxu0 %v431
    %505 = vmatpush.msra.mxu0 %v429
    %506 = vmatpush.msra.mxu0 %v427
    %507 = vmatpush.msra.mxu0 %v425
    %508 = vmatpush.msra.mxu0 %v423
    %509 = vmatpush.msra.mxu0 %v421
    %510 = vmatpush.msra.mxu0 %v419
    %511 = vmatmul.f32.gmra.mxu0 %v463
    %v512 = vpop.f32.mrf.mxu0
    %v513 = vadd.f32 %v487, %v512
    %514 = vmatmul.f32.gmra.mxu0 %v465
    %v515 = vpop.f32.mrf.mxu0
    %v516 = vadd.f32 %v490, %v515
    %517 = vmatmul.f32.gmra.mxu0 %v467
    %v518 = vpop.f32.mrf.mxu0
    %v519 = vadd.f32 %v493, %v518
    %520 = vdwg.mxu0
    %521 = vmatpush.msra.mxu0 %v418
    %522 = vmatpush.msra.mxu0 %v416
    %523 = vmatpush.msra.mxu0 %v414
    %524 = vmatpush.msra.mxu0 %v412
    %525 = vmatpush.msra.mxu0 %v410
    %526 = vmatpush.msra.mxu0 %v408
    %527 = vmatpush.msra.mxu0 %v406
    %528 = vmatpush.msra.mxu0 %v404
    %529 = vmatpush.msra.mxu0 %v402
    %530 = vmatpush.msra.mxu0 %v400
    %531 = vmatpush.msra.mxu0 %v398
    %532 = vmatpush.msra.mxu0 %v396
    %533 = vmatpush.msra.mxu0 %v394
    %534 = vmatpush.msra.mxu0 %v392
    %535 = vmatpush.msra.mxu0 %v390
    %536 = vmatpush.msra.mxu0 %v388
    %537 = vmatmul.f32.gmra.mxu0 %v451
    %v538 = vpop.f32.mrf.mxu0
    %v539 = vadd.f32 0.0, %v538
    %540 = vmatmul.f32.gmra.mxu0 %v456
    %v541 = vpop.f32.mrf.mxu0
    %v542 = vadd.f32 0.0, %v541
    %543 = vmatmul.f32.gmra.mxu0 %v455
    %v544 = vpop.f32.mrf.mxu0
    %v545 = vadd.f32 0.0, %v544
    %546 = vdwg.mxu0
    %547 = vmatpush.msra.mxu0 0.0
    %548 = vmatpush.msra.mxu0 0.0
    %549 = vmatpush.msra.mxu0 0.0
    %550 = vmatpush.msra.mxu0 0.0
    %551 = vmatpush.msra.mxu0 %v442
    %552 = vmatpush.msra.mxu0 %v440
    %553 = vmatpush.msra.mxu0 %v438
    %554 = vmatpush.msra.mxu0 %v436
    %555 = vmatpush.msra.mxu0 %v434
    %556 = vmatpush.msra.mxu0 %v432
    %557 = vmatpush.msra.mxu0 %v430
    %558 = vmatpush.msra.mxu0 %v428
    %559 = vmatpush.msra.mxu0 %v426
    %560 = vmatpush.msra.mxu0 %v424
    %561 = vmatpush.msra.mxu0 %v422
    %562 = vmatpush.msra.mxu0 %v420
    %563 = vmatmul.f32.gmra.mxu0 %v463
    %v564 = vpop.f32.mrf.mxu0
    %v565 = vadd.f32 %v539, %v564
    %566 = vmatmul.f32.gmra.mxu0 %v465
    %v567 = vpop.f32.mrf.mxu0
    %v568 = vadd.f32 %v542, %v567
    %569 = vmatmul.f32.gmra.mxu0 %v467
    %v570 = vpop.f32.mrf.mxu0
    %v571 = vadd.f32 %v545, %v570
    %572 = vdwg.mxu0
    %v573 = vsel %vm462, %v325, 0
    %v575 = vsel %vm462, %v327, 0
    %v577 = vsel %vm462, %v329, 0
    %579 = vmatpush.msra.mxu0 %v360
    %580 = vmatpush.msra.mxu0 %v358
    %581 = vmatpush.msra.mxu0 %v356
    %582 = vmatpush.msra.mxu0 %v354
    %583 = vmatpush.msra.mxu0 %v352
    %584 = vmatpush.msra.mxu0 %v350
    %585 = vmatpush.msra.mxu0 %v348
    %586 = vmatpush.msra.mxu0 %v346
    %587 = vmatpush.msra.mxu0 %v344
    %588 = vmatpush.msra.mxu0 %v342
    %589 = vmatpush.msra.mxu0 %v340
    %590 = vmatpush.msra.mxu0 %v338
    %591 = vmatpush.msra.mxu0 %v336
    %592 = vmatpush.msra.mxu0 %v334
    %593 = vmatpush.msra.mxu0 %v332
    %594 = vmatpush.msra.mxu0 %v330
    %595 = vmatmul.f32.gmra.mxu0 %v324
    %v596 = vpop.f32.mrf.mxu0
    %v597 = vadd.f32 %v513, %v596
    %598 = vmatmul.f32.gmra.mxu0 %v326
    %v599 = vpop.f32.mrf.mxu0
    %v600 = vadd.f32 %v516, %v599
    %601 = vmatmul.f32.gmra.mxu0 %v328
    %v602 = vpop.f32.mrf.mxu0
    %v603 = vadd.f32 %v519, %v602
    %604 = vdwg.mxu0
    %605 = vmatpush.msra.mxu0 0.0
    %606 = vmatpush.msra.mxu0 0.0
    %607 = vmatpush.msra.mxu0 0.0
    %608 = vmatpush.msra.mxu0 0.0
    %609 = vmatpush.msra.mxu0 %v384
    %610 = vmatpush.msra.mxu0 %v382
    %611 = vmatpush.msra.mxu0 %v380
    %612 = vmatpush.msra.mxu0 %v378
    %613 = vmatpush.msra.mxu0 %v376
    %614 = vmatpush.msra.mxu0 %v374
    %615 = vmatpush.msra.mxu0 %v372
    %616 = vmatpush.msra.mxu0 %v370
    %617 = vmatpush.msra.mxu0 %v368
    %618 = vmatpush.msra.mxu0 %v366
    %619 = vmatpush.msra.mxu0 %v364
    %620 = vmatpush.msra.mxu0 %v362
    %621 = vmatmul.f32.gmra.mxu0 %v573
    %v622 = vpop.f32.mrf.mxu0
    %v623 = vadd.f32 %v597, %v622
    %624 = vmatmul.f32.gmra.mxu0 %v575
    %v625 = vpop.f32.mrf.mxu0
    %v626 = vadd.f32 %v600, %v625
    %627 = vmatmul.f32.gmra.mxu0 %v577
    %v628 = vpop.f32.mrf.mxu0
    %v629 = vadd.f32 %v603, %v628
    %630 = vdwg.mxu0
    %631 = vmatpush.msra.mxu0 %v361
    %632 = vmatpush.msra.mxu0 %v359
    %633 = vmatpush.msra.mxu0 %v357
    %634 = vmatpush.msra.mxu0 %v355
    %635 = vmatpush.msra.mxu0 %v353
    %636 = vmatpush.msra.mxu0 %v351
    %637 = vmatpush.msra.mxu0 %v349
    %638 = vmatpush.msra.mxu0 %v347
    %639 = vmatpush.msra.mxu0 %v345
    %640 = vmatpush.msra.mxu0 %v343
    %641 = vmatpush.msra.mxu0 %v341
    %642 = vmatpush.msra.mxu0 %v339
    %643 = vmatpush.msra.mxu0 %v337
    %644 = vmatpush.msra.mxu0 %v335
    %645 = vmatpush.msra.mxu0 %v333
    %646 = vmatpush.msra.mxu0 %v331
    %647 = vmatmul.f32.gmra.mxu0 %v324
    %v648 = vpop.f32.mrf.mxu0
    %v649 = vadd.f32 %v565, %v648
    %650 = vmatmul.f32.gmra.mxu0 %v326
    %v651 = vpop.f32.mrf.mxu0
    %v652 = vadd.f32 %v568, %v651
    %653 = vmatmul.f32.gmra.mxu0 %v328
    %v654 = vpop.f32.mrf.mxu0
    %v655 = vadd.f32 %v571, %v654
    %656 = vdwg.mxu0
    %657 = vmatpush.msra.mxu0 0.0
    %658 = vmatpush.msra.mxu0 0.0
    %659 = vmatpush.msra.mxu0 0.0
    %660 = vmatpush.msra.mxu0 0.0
    %661 = vmatpush.msra.mxu0 %v385
    %662 = vmatpush.msra.mxu0 %v383
    %663 = vmatpush.msra.mxu0 %v381
    %664 = vmatpush.msra.mxu0 %v379
    %665 = vmatpush.msra.mxu0 %v377
    %666 = vmatpush.msra.mxu0 %v375
    %667 = vmatpush.msra.mxu0 %v373
    %668 = vmatpush.msra.mxu0 %v371
    %669 = vmatpush.msra.mxu0 %v369
    %670 = vmatpush.msra.mxu0 %v367
    %671 = vmatpush.msra.mxu0 %v365
    %672 = vmatpush.msra.mxu0 %v363
    %673 = vmatmul.f32.gmra.mxu0 %v573
    %v674 = vpop.f32.mrf.mxu0
    %v675 = vadd.f32 %v649, %v674
    %676 = vmatmul.f32.gmra.mxu0 %v575
    %v677 = vpop.f32.mrf.mxu0
    %v678 = vadd.f32 %v652, %v677
    %679 = vmatmul.f32.gmra.mxu0 %v577
    %v680 = vpop.f32.mrf.mxu0
    %v681 = vadd.f32 %v655, %v680
    %682 = vdwg.mxu0
    %s683 = scalar_lea.vmem %s4, 896
    %v684 = vld [vmem:[%s683] sm:$0xff]
    %v685 = vld [vmem:[%s683 + $0x8] sm:$0xff]
    %v686 = vld [vmem:[%s683 + $0x10] sm:$0xff]
    %v687 = vld [vmem:[%s683 + $0x18] sm:$0xff]
    %v688 = vld [vmem:[%s683 + $0x20] sm:$0xff]
    %v689 = vld [vmem:[%s683 + $0x28] sm:$0xff]
    %v690 = vld [vmem:[%s683 + $0x30] sm:$0xff]
    %v691 = vld [vmem:[%s683 + $0x38] sm:$0xff]
    %v692 = vld [vmem:[%s683 + $0x40] sm:$0xff]
    %v693 = vld [vmem:[%s683 + $0x48] sm:$0xff]
    %v694 = vld [vmem:[%s683 + $0x50] sm:$0xff]
    %v695 = vld [vmem:[%s683 + $0x58] sm:$0xff]
    %v696 = vld [vmem:[%s683 + $0x60] sm:$0xff]
    %v697 = vld [vmem:[%s683 + $0x68] sm:$0xff]
    %v698 = vld [vmem:[%s683 + $0x70] sm:$0xff]
    %v699 = vld [vmem:[%s683 + $0x78] sm:$0xff]
    %v700 = vld [vmem:[%s683 + $0x80] sm:$0xff]
    %v701 = vld [vmem:[%s683 + $0x88] sm:$0xff]
    %v702 = vld [vmem:[%s683 + $0x90] sm:$0xff]
    %v703 = vld [vmem:[%s683 + $0x98] sm:$0xff]
    %v704 = vld [vmem:[%s683 + $0xa0] sm:$0xff]
    %v705 = vld [vmem:[%s683 + $0xa8] sm:$0xff]
    %v706 = vld [vmem:[%s683 + $0xb0] sm:$0xff]
    %v707 = vld [vmem:[%s683 + $0xb8] sm:$0xff]
    %v708 = vld [vmem:[%s683 + $0xc0] sm:$0xff]
    %v709 = vld [vmem:[%s683 + $0xc8] sm:$0xff]
    %v710 = vld [vmem:[%s683 + $0xd0] sm:$0xff]
    %v711 = vld [vmem:[%s683 + $0xd8] sm:$0xff]
    %v712 = vld [vmem:[%s683 + $0xe0] sm:$0xff]
    %v713 = vld [vmem:[%s683 + $0xe8] sm:$0xff]
    %v714 = vld [vmem:[%s683 + $0xf0] sm:$0xff]
    %v715 = vld [vmem:[%s683 + $0xf8] sm:$0xff]
    %v716 = vld [vmem:[%s683 + $0x100] sm:$0xff]
    %v717 = vld [vmem:[%s683 + $0x108] sm:$0xff]
    %v718 = vld [vmem:[%s683 + $0x110] sm:$0xff]
    %v719 = vld [vmem:[%s683 + $0x118] sm:$0xff]
    %v720 = vld [vmem:[%s683 + $0x120] sm:$0xff]
    %v721 = vld [vmem:[%s683 + $0x128] sm:$0xff]
    %v722 = vld [vmem:[%s683 + $0x130] sm:$0xff]
    %v723 = vld [vmem:[%s683 + $0x138] sm:$0xff]
    %v724 = vld [vmem:[%s683 + $0x140] sm:$0xff]
    %v725 = vld [vmem:[%s683 + $0x148] sm:$0xff]
    %v726 = vld [vmem:[%s683 + $0x150] sm:$0xff]
    %v727 = vld [vmem:[%s683 + $0x158] sm:$0xff]
    %v728 = vld [vmem:[%s683 + $0x160] sm:$0xff]
    %v729 = vld [vmem:[%s683 + $0x168] sm:$0xff]
    %v730 = vld [vmem:[%s683 + $0x170] sm:$0xff]
    %v731 = vld [vmem:[%s683 + $0x178] sm:$0xff]
    %v732 = vld [vmem:[%s683 + $0x180] sm:$0xff]
    %v733 = vld [vmem:[%s683 + $0x188] sm:$0xff]
    %v734 = vld [vmem:[%s683 + $0x190] sm:$0xff]
    %v735 = vld [vmem:[%s683 + $0x198] sm:$0xff]
    %v736 = vld [vmem:[%s683 + $0x1a0] sm:$0xff]
    %v737 = vld [vmem:[%s683 + $0x1a8] sm:$0xff]
    %v738 = vld [vmem:[%s683 + $0x1b0] sm:$0xff]
    %v739 = vld [vmem:[%s683 + $0x1b8] sm:$0xff]
    %vm740 = vcmask 1045504
    %v741 = vrot.slane %v324, 2
    %v742 = vrot.slane %v326, 2
    %v743 = vsel %vm740, %v741, %v742
    %v744 = vrot.slane %v325, 2
    %v745 = vrot.slane %v327, 2
    %v746 = vsel %vm740, %v744, %v745
    %v747 = vrot.slane %v328, 2
    %v748 = vsel %vm740, %v742, %v747
    %v749 = vrot.slane %v329, 2
    %v750 = vsel %vm740, %v745, %v749
    %v754 = vsel %vm462, %v746, 0
    %v756 = vsel %vm462, %v750, 0
    %v758 = vsel %vm462, %v749, 0
    %760 = vmatpush.msra.mxu0 %v714
    %761 = vmatpush.msra.mxu0 %v712
    %762 = vmatpush.msra.mxu0 %v710
    %763 = vmatpush.msra.mxu0 %v708
    %764 = vmatpush.msra.mxu0 %v706
    %765 = vmatpush.msra.mxu0 %v704
    %766 = vmatpush.msra.mxu0 %v702
    %767 = vmatpush.msra.mxu0 %v700
    %768 = vmatpush.msra.mxu0 %v698
    %769 = vmatpush.msra.mxu0 %v696
    %770 = vmatpush.msra.mxu0 %v694
    %771 = vmatpush.msra.mxu0 %v692
    %772 = vmatpush.msra.mxu0 %v690
    %773 = vmatpush.msra.mxu0 %v688
    %774 = vmatpush.msra.mxu0 %v686
    %775 = vmatpush.msra.mxu0 %v684
    %776 = vmatmul.f32.gmra.mxu0 %v743
    %v777 = vpop.f32.mrf.mxu0
    %v778 = vadd.f32 0.0, %v777
    %779 = vmatmul.f32.gmra.mxu0 %v748
    %v780 = vpop.f32.mrf.mxu0
    %v781 = vadd.f32 0.0, %v780
    %782 = vmatmul.f32.gmra.mxu0 %v747
    %v783 = vpop.f32.mrf.mxu0
    %v784 = vadd.f32 0.0, %v783
    %785 = vdwg.mxu0
    %786 = vmatpush.msra.mxu0 0.0
    %787 = vmatpush.msra.mxu0 0.0
    %788 = vmatpush.msra.mxu0 0.0
    %789 = vmatpush.msra.mxu0 0.0
    %790 = vmatpush.msra.mxu0 %v738
    %791 = vmatpush.msra.mxu0 %v736
    %792 = vmatpush.msra.mxu0 %v734
    %793 = vmatpush.msra.mxu0 %v732
    %794 = vmatpush.msra.mxu0 %v730
    %795 = vmatpush.msra.mxu0 %v728
    %796 = vmatpush.msra.mxu0 %v726
    %797 = vmatpush.msra.mxu0 %v724
    %798 = vmatpush.msra.mxu0 %v722
    %799 = vmatpush.msra.mxu0 %v720
    %800 = vmatpush.msra.mxu0 %v718
    %801 = vmatpush.msra.mxu0 %v716
    %802 = vmatmul.f32.gmra.mxu0 %v754
    %v803 = vpop.f32.mrf.mxu0
    %v804 = vadd.f32 %v778, %v803
    %805 = vmatmul.f32.gmra.mxu0 %v756
    %v806 = vpop.f32.mrf.mxu0
    %v807 = vadd.f32 %v781, %v806
    %808 = vmatmul.f32.gmra.mxu0 %v758
    %v809 = vpop.f32.mrf.mxu0
    %v810 = vadd.f32 %v784, %v809
    %811 = vdwg.mxu0
    %812 = vmatpush.msra.mxu0 %v715
    %813 = vmatpush.msra.mxu0 %v713
    %814 = vmatpush.msra.mxu0 %v711
    %815 = vmatpush.msra.mxu0 %v709
    %816 = vmatpush.msra.mxu0 %v707
    %817 = vmatpush.msra.mxu0 %v705
    %818 = vmatpush.msra.mxu0 %v703
    %819 = vmatpush.msra.mxu0 %v701
    %820 = vmatpush.msra.mxu0 %v699
    %821 = vmatpush.msra.mxu0 %v697
    %822 = vmatpush.msra.mxu0 %v695
    %823 = vmatpush.msra.mxu0 %v693
    %824 = vmatpush.msra.mxu0 %v691
    %825 = vmatpush.msra.mxu0 %v689
    %826 = vmatpush.msra.mxu0 %v687
    %827 = vmatpush.msra.mxu0 %v685
    %828 = vmatmul.f32.gmra.mxu0 %v743
    %v829 = vpop.f32.mrf.mxu0
    %v830 = vadd.f32 0.0, %v829
    %831 = vmatmul.f32.gmra.mxu0 %v748
    %v832 = vpop.f32.mrf.mxu0
    %v833 = vadd.f32 0.0, %v832
    %834 = vmatmul.f32.gmra.mxu0 %v747
    %v835 = vpop.f32.mrf.mxu0
    %v836 = vadd.f32 0.0, %v835
    %837 = vdwg.mxu0
    %838 = vmatpush.msra.mxu0 0.0
    %839 = vmatpush.msra.mxu0 0.0
    %840 = vmatpush.msra.mxu0 0.0
    %841 = vmatpush.msra.mxu0 0.0
    %842 = vmatpush.msra.mxu0 %v739
    %843 = vmatpush.msra.mxu0 %v737
    %844 = vmatpush.msra.mxu0 %v735
    %845 = vmatpush.msra.mxu0 %v733
    %846 = vmatpush.msra.mxu0 %v731
    %847 = vmatpush.msra.mxu0 %v729
    %848 = vmatpush.msra.mxu0 %v727
    %849 = vmatpush.msra.mxu0 %v725
    %850 = vmatpush.msra.mxu0 %v723
    %851 = vmatpush.msra.mxu0 %v721
    %852 = vmatpush.msra.mxu0 %v719
    %853 = vmatpush.msra.mxu0 %v717
    %854 = vmatmul.f32.gmra.mxu0 %v754
    %v855 = vpop.f32.mrf.mxu0
    %v856 = vadd.f32 %v830, %v855
    %857 = vmatmul.f32.gmra.mxu0 %v756
    %v858 = vpop.f32.mrf.mxu0
    %v859 = vadd.f32 %v833, %v858
    %860 = vmatmul.f32.gmra.mxu0 %v758
    %v861 = vpop.f32.mrf.mxu0
    %v862 = vadd.f32 %v836, %v861
    %863 = vdwg.mxu0
    %v864 = vadd.f32 %v623, %v804
    %v865 = vadd.f32 %v675, %v856
    %v866 = vadd.f32 %v626, %v807
    %v867 = vadd.f32 %v678, %v859
    %v868 = vadd.f32 %v629, %v810
    %v869 = vadd.f32 %v681, %v862
    %v870 = vld [vmem:[%s5] sm:$0x3]
    %v872 = vperm.slane %v870, 0
    %v873 = vperm.slane %v870, 1
    %v876 = vadd.f32 %v864, %v872
    %v877 = vadd.f32 %v865, %v873
    %v878 = vadd.f32 %v866, %v872
    %v879 = vadd.f32 %v867, %v873
    %v880 = vadd.f32 %v868, %v872
    %v881 = vadd.f32 %v869, %v873
    %v882 = vmax.f32 %v876, 0.0
    %v883 = vmax.f32 %v877, 0.0
    %v884 = vmax.f32 %v878, 0.0
    %v885 = vmax.f32 %v879, 0.0
    %v886 = vmax.f32 %v880, 0.0
    %v887 = vmax.f32 %v881, 0.0
    %v888 = vld [vmem:[%s6] sm:$0xff]
    %v889 = vld [vmem:[%s6 + $0x8] sm:$0xff]
    %v890 = vld [vmem:[%s6 + $0x10] sm:$0xff]
    %v891 = vld [vmem:[%s6 + $0x18] sm:$0xff]
    %v892 = vld [vmem:[%s6 + $0x20] sm:$0xff]
    %v893 = vld [vmem:[%s6 + $0x28] sm:$0xff]
    %v894 = vld [vmem:[%s6 + $0x30] sm:$0xff]
    %v895 = vld [vmem:[%s6 + $0x38] sm:$0xff]
    %v896 = vld [vmem:[%s6 + $0x40] sm:$0xff]
    %v897 = vld [vmem:[%s6 + $0x48] sm:$0xff]
    %v898 = vld [vmem:[%s6 + $0x50] sm:$0xff]
    %v899 = vld [vmem:[%s6 + $0x58] sm:$0xff]
    %v900 = vld [vmem:[%s6 + $0x60] sm:$0xff]
    %v901 = vld [vmem:[%s6 + $0x68] sm:$0xff]
    %v902 = vld [vmem:[%s6 + $0x70] sm:$0xff]
    %v903 = vld [vmem:[%s6 + $0x78] sm:$0xff]
    %v904 = vld [vmem:[%s6 + $0x80] sm:$0xff]
    %v905 = vld [vmem:[%s6 + $0x88] sm:$0xff]
    %v906 = vld [vmem:[%s6 + $0x90] sm:$0xff]
    %v907 = vld [vmem:[%s6 + $0x98] sm:$0xff]
    %s908 = scalar_lea.vmem %s6, 160
    %v909 = vld [vmem:[%s908] sm:$0xff]
    %v910 = vld [vmem:[%s908 + $0x8] sm:$0xff]
    %v911 = vld [vmem:[%s908 + $0x10] sm:$0xff]
    %v912 = vld [vmem:[%s908 + $0x18] sm:$0xff]
    %v913 = vld [vmem:[%s908 + $0x20] sm:$0xff]
    %v914 = vld [vmem:[%s908 + $0x28] sm:$0xff]
    %v915 = vld [vmem:[%s908 + $0x30] sm:$0xff]
    %v916 = vld [vmem:[%s908 + $0x38] sm:$0xff]
    %v917 = vld [vmem:[%s908 + $0x40] sm:$0xff]
    %v918 = vld [vmem:[%s908 + $0x48] sm:$0xff]
    %v919 = vld [vmem:[%s908 + $0x50] sm:$0xff]
    %v920 = vld [vmem:[%s908 + $0x58] sm:$0xff]
    %v921 = vld [vmem:[%s908 + $0x60] sm:$0xff]
    %v922 = vld [vmem:[%s908 + $0x68] sm:$0xff]
    %v923 = vld [vmem:[%s908 + $0x70] sm:$0xff]
    %v924 = vld [vmem:[%s908 + $0x78] sm:$0xff]
    %v925 = vld [vmem:[%s908 + $0x80] sm:$0xff]
    %v926 = vld [vmem:[%s908 + $0x88] sm:$0xff]
    %v927 = vld [vmem:[%s908 + $0x90] sm:$0xff]
    %v928 = vld [vmem:[%s908 + $0x98] sm:$0xff]
    %v935 = vrot.slane %v882, 1
    %v936 = vrot.slane %v884, 1
    %v937 = vsel %vm240, %v935, %v936
    %v938 = vrot.slane %v883, 1
    %v939 = vrot.slane %v885, 1
    %v940 = vsel %vm240, %v938, %v939
    %v941 = vrot.slane %v886, 1
    %v942 = vsel %vm240, %v936, %v941
    %v943 = vrot.slane %v887, 1
    %v944 = vsel %vm240, %v939, %v943
    %vm948 = vcmask 261120
    %v949 = vsel %vm948, %v940, 0
    %v951 = vsel %vm948, %v944, 0
    %v953 = vsel %vm948, %v943, 0
    %955 = vmatpush.msra.mxu0 %v924
    %956 = vmatpush.msra.mxu0 %v923
    %957 = vmatpush.msra.mxu0 %v922
    %958 = vmatpush.msra.mxu0 %v921
    %959 = vmatpush.msra.mxu0 %v920
    %960 = vmatpush.msra.mxu0 %v919
    %961 = vmatpush.msra.mxu0 %v918
    %962 = vmatpush.msra.mxu0 %v917
    %963 = vmatpush.msra.mxu0 %v916
    %964 = vmatpush.msra.mxu0 %v915
    %965 = vmatpush.msra.mxu0 %v914
    %966 = vmatpush.msra.mxu0 %v913
    %967 = vmatpush.msra.mxu0 %v912
    %968 = vmatpush.msra.mxu0 %v911
    %969 = vmatpush.msra.mxu0 %v910
    %970 = vmatpush.msra.mxu0 %v909
    %971 = vmatmul.f32.gmra.mxu0 %v937
    %v972 = vpop.f32.mrf.mxu0
    %v973 = vadd.f32 0.0, %v972
    %974 = vmatmul.f32.gmra.mxu0 %v942
    %v975 = vpop.f32.mrf.mxu0
    %v976 = vadd.f32 0.0, %v975
    %977 = vmatmul.f32.gmra.mxu0 %v941
    %v978 = vpop.f32.mrf.mxu0
    %v979 = vadd.f32 0.0, %v978
    %980 = vdwg.mxu0
    %981 = vmatpush.msra.mxu0 0.0
    %982 = vmatpush.msra.mxu0 0.0
    %983 = vmatpush.msra.mxu0 0.0
    %984 = vmatpush.msra.mxu0 0.0
    %985 = vmatpush.msra.mxu0 0.0
    %986 = vmatpush.msra.mxu0 0.0
    %987 = vmatpush.msra.mxu0 0.0
    %988 = vmatpush.msra.mxu0 0.0
    %989 = vmatpush.msra.mxu0 0.0
    %990 = vmatpush.msra.mxu0 0.0
    %991 = vmatpush.msra.mxu0 0.0
    %992 = vmatpush.msra.mxu0 0.0
    %993 = vmatpush.msra.mxu0 %v928
    %994 = vmatpush.msra.mxu0 %v927
    %995 = vmatpush.msra.mxu0 %v926
    %996 = vmatpush.msra.mxu0 %v925
    %997 = vmatmul.f32.gmra.mxu0 %v949
    %v998 = vpop.f32.mrf.mxu0
    %v999 = vadd.f32 %v973, %v998
    %1000 = vmatmul.f32.gmra.mxu0 %v951
    %v1001 = vpop.f32.mrf.mxu0
    %v1002 = vadd.f32 %v976, %v1001
    %1003 = vmatmul.f32.gmra.mxu0 %v953
    %v1004 = vpop.f32.mrf.mxu0
    %v1005 = vadd.f32 %v979, %v1004
    %1006 = vdwg.mxu0
    %v1007 = vsel %vm948, %v883, 0
    %v1009 = vsel %vm948, %v885, 0
    %v1011 = vsel %vm948, %v887, 0
    %1013 = vmatpush.msra.mxu0 %v903
    %1014 = vmatpush.msra.mxu0 %v902
    %1015 = vmatpush.msra.mxu0 %v901
    %1016 = vmatpush.msra.mxu0 %v900
    %1017 = vmatpush.msra.mxu0 %v899
    %1018 = vmatpush.msra.mxu0 %v898
    %1019 = vmatpush.msra.mxu0 %v897
    %1020 = vmatpush.msra.mxu0 %v896
    %1021 = vmatpush.msra.mxu0 %v895
    %1022 = vmatpush.msra.mxu0 %v894
    %1023 = vmatpush.msra.mxu0 %v893
    %1024 = vmatpush.msra.mxu0 %v892
    %1025 = vmatpush.msra.mxu0 %v891
    %1026 = vmatpush.msra.mxu0 %v890
    %1027 = vmatpush.msra.mxu0 %v889
    %1028 = vmatpush.msra.mxu0 %v888
    %1029 = vmatmul.f32.gmra.mxu0 %v882
    %v1030 = vpop.f32.mrf.mxu0
    %v1031 = vadd.f32 %v999, %v1030
    %1032 = vmatmul.f32.gmra.mxu0 %v884
    %v1033 = vpop.f32.mrf.mxu0
    %v1034 = vadd.f32 %v1002, %v1033
    %1035 = vmatmul.f32.gmra.mxu0 %v886
    %v1036 = vpop.f32.mrf.mxu0
    %v1037 = vadd.f32 %v1005, %v1036
    %1038 = vdwg.mxu0
    %1039 = vmatpush.msra.mxu0 0.0
    %1040 = vmatpush.msra.mxu0 0.0
    %1041 = vmatpush.msra.mxu0 0.0
    %1042 = vmatpush.msra.mxu0 0.0
    %1043 = vmatpush.msra.mxu0 0.0
    %1044 = vmatpush.msra.mxu0 0.0
    %1045 = vmatpush.msra.mxu0 0.0
    %1046 = vmatpush.msra.mxu0 0.0
    %1047 = vmatpush.msra.mxu0 0.0
    %1048 = vmatpush.msra.mxu0 0.0
    %1049 = vmatpush.msra.mxu0 0.0
    %1050 = vmatpush.msra.mxu0 0.0
    %1051 = vmatpush.msra.mxu0 %v907
    %1052 = vmatpush.msra.mxu0 %v906
    %1053 = vmatpush.msra.mxu0 %v905
    %1054 = vmatpush.msra.mxu0 %v904
    %1055 = vmatmul.f32.gmra.mxu0 %v1007
    %v1056 = vpop.f32.mrf.mxu0
    %v1057 = vadd.f32 %v1031, %v1056
    %1058 = vmatmul.f32.gmra.mxu0 %v1009
    %v1059 = vpop.f32.mrf.mxu0
    %v1060 = vadd.f32 %v1034, %v1059
    %1061 = vmatmul.f32.gmra.mxu0 %v1011
    %v1062 = vpop.f32.mrf.mxu0
    %v1063 = vadd.f32 %v1037, %v1062
    %1064 = vdwg.mxu0
    %s1065 = scalar_lea.vmem %s6, 320
    %v1066 = vld [vmem:[%s1065] sm:$0xff]
    %v1067 = vld [vmem:[%s1065 + $0x8] sm:$0xff]
    %v1068 = vld [vmem:[%s1065 + $0x10] sm:$0xff]
    %v1069 = vld [vmem:[%s1065 + $0x18] sm:$0xff]
    %v1070 = vld [vmem:[%s1065 + $0x20] sm:$0xff]
    %v1071 = vld [vmem:[%s1065 + $0x28] sm:$0xff]
    %v1072 = vld [vmem:[%s1065 + $0x30] sm:$0xff]
    %v1073 = vld [vmem:[%s1065 + $0x38] sm:$0xff]
    %v1074 = vld [vmem:[%s1065 + $0x40] sm:$0xff]
    %v1075 = vld [vmem:[%s1065 + $0x48] sm:$0xff]
    %v1076 = vld [vmem:[%s1065 + $0x50] sm:$0xff]
    %v1077 = vld [vmem:[%s1065 + $0x58] sm:$0xff]
    %v1078 = vld [vmem:[%s1065 + $0x60] sm:$0xff]
    %v1079 = vld [vmem:[%s1065 + $0x68] sm:$0xff]
    %v1080 = vld [vmem:[%s1065 + $0x70] sm:$0xff]
    %v1081 = vld [vmem:[%s1065 + $0x78] sm:$0xff]
    %v1082 = vld [vmem:[%s1065 + $0x80] sm:$0xff]
    %v1083 = vld [vmem:[%s1065 + $0x88] sm:$0xff]
    %v1084 = vld [vmem:[%s1065 + $0x90] sm:$0xff]
    %v1085 = vld [vmem:[%s1065 + $0x98] sm:$0xff]
    %v1086 = vrot.slane %v882, 2
    %v1087 = vrot.slane %v884, 2
    %v1088 = vsel %vm740, %v1086, %v1087
    %v1089 = vrot.slane %v883, 2
    %v1090 = vrot.slane %v885, 2
    %v1091 = vsel %vm740, %v1089, %v1090
    %v1092 = vrot.slane %v886, 2
    %v1093 = vsel %vm740, %v1087, %v1092
    %v1094 = vrot.slane %v887, 2
    %v1095 = vsel %vm740, %v1090, %v1094
    %v1099 = vsel %vm948, %v1091, 0
    %v1101 = vsel %vm948, %v1095, 0
    %v1103 = vsel %vm948, %v1094, 0
    %1105 = vmatpush.msra.mxu0 %v1081
    %1106 = vmatpush.msra.mxu0 %v1080
    %1107 = vmatpush.msra.mxu0 %v1079
    %1108 = vmatpush.msra.mxu0 %v1078
    %1109 = vmatpush.msra.mxu0 %v1077
    %1110 = vmatpush.msra.mxu0 %v1076
    %1111 = vmatpush.msra.mxu0 %v1075
    %1112 = vmatpush.msra.mxu0 %v1074
    %1113 = vmatpush.msra.mxu0 %v1073
    %1114 = vmatpush.msra.mxu0 %v1072
    %1115 = vmatpush.msra.mxu0 %v1071
    %1116 = vmatpush.msra.mxu0 %v1070
    %1117 = vmatpush.msra.mxu0 %v1069
    %1118 = vmatpush.msra.mxu0 %v1068
    %1119 = vmatpush.msra.mxu0 %v1067
    %1120 = vmatpush.msra.mxu0 %v1066
    %1121 = vmatmul.f32.gmra.mxu0 %v1088
    %v1122 = vpop.f32.mrf.mxu0
    %v1123 = vadd.f32 0.0, %v1122
    %1124 = vmatmul.f32.gmra.mxu0 %v1093
    %v1125 = vpop.f32.mrf.mxu0
    %v1126 = vadd.f32 0.0, %v1125
    %1127 = vmatmul.f32.gmra.mxu0 %v1092
    %v1128 = vpop.f32.mrf.mxu0
    %v1129 = vadd.f32 0.0, %v1128
    %1130 = vdwg.mxu0
    %1131 = vmatpush.msra.mxu0 0.0
    %1132 = vmatpush.msra.mxu0 0.0
    %1133 = vmatpush.msra.mxu0 0.0
    %1134 = vmatpush.msra.mxu0 0.0
    %1135 = vmatpush.msra.mxu0 0.0
    %1136 = vmatpush.msra.mxu0 0.0
    %1137 = vmatpush.msra.mxu0 0.0
    %1138 = vmatpush.msra.mxu0 0.0
    %1139 = vmatpush.msra.mxu0 0.0
    %1140 = vmatpush.msra.mxu0 0.0
    %1141 = vmatpush.msra.mxu0 0.0
    %1142 = vmatpush.msra.mxu0 0.0
    %1143 = vmatpush.msra.mxu0 %v1085
    %1144 = vmatpush.msra.mxu0 %v1084
    %1145 = vmatpush.msra.mxu0 %v1083
    %1146 = vmatpush.msra.mxu0 %v1082
    %1147 = vmatmul.f32.gmra.mxu0 %v1099
    %v1148 = vpop.f32.mrf.mxu0
    %v1149 = vadd.f32 %v1123, %v1148
    %1150 = vmatmul.f32.gmra.mxu0 %v1101
    %v1151 = vpop.f32.mrf.mxu0
    %v1152 = vadd.f32 %v1126, %v1151
    %1153 = vmatmul.f32.gmra.mxu0 %v1103
    %v1154 = vpop.f32.mrf.mxu0
    %v1155 = vadd.f32 %v1129, %v1154
    %1156 = vdwg.mxu0
    %v1157 = vadd.f32 %v1057, %v1149
    %v1158 = vadd.f32 %v1060, %v1152
    %v1159 = vadd.f32 %v1063, %v1155
    %v1160 = vld [vmem:[%s7] sm:$0x1]
    %v1162 = vperm.slane %v1160, 0
    %v1164 = vadd.f32 %v1157, %v1162
    %v1165 = vadd.f32 %v1158, %v1162
    %v1166 = vadd.f32 %v1159, %v1162
    %v1167 = vmax.f32 %v1164, 0.0
    %v1168 = vmax.f32 %v1165, 0.0
    %v1169 = vmax.f32 %v1166, 0.0
    %v1170 = vld [vmem:[%s8] sm:$0xff]
    %v1171 = vld [vmem:[%s8 + $0x8] sm:$0xff]
    %v1172 = vld [vmem:[%s8 + $0x10] sm:$0xff]
    %v1173 = vld [vmem:[%s8 + $0x18] sm:$0xff]
    %v1174 = vld [vmem:[%s8 + $0x20] sm:$0xff]
    %v1175 = vld [vmem:[%s8 + $0x28] sm:$0xff]
    %v1176 = vld [vmem:[%s8 + $0x30] sm:$0xff]
    %v1177 = vld [vmem:[%s8 + $0x38] sm:$0xff]
    %v1178 = vld [vmem:[%s8 + $0x40] sm:$0xff]
    %v1179 = vld [vmem:[%s8 + $0x48] sm:$0xff]
    %v1180 = vld [vmem:[%s8 + $0x50] sm:$0xff]
    %v1181 = vld [vmem:[%s8 + $0x58] sm:$0xff]
    %s1182 = scalar_lea.vmem %s8, 96
    %v1183 = vld [vmem:[%s1182] sm:$0xff]
    %v1184 = vld [vmem:[%s1182 + $0x8] sm:$0xff]
    %v1185 = vld [vmem:[%s1182 + $0x10] sm:$0xff]
    %v1186 = vld [vmem:[%s1182 + $0x18] sm:$0xff]
    %v1187 = vld [vmem:[%s1182 + $0x20] sm:$0xff]
    %v1188 = vld [vmem:[%s1182 + $0x28] sm:$0xff]
    %v1189 = vld [vmem:[%s1182 + $0x30] sm:$0xff]
    %v1190 = vld [vmem:[%s1182 + $0x38] sm:$0xff]
    %v1191 = vld [vmem:[%s1182 + $0x40] sm:$0xff]
    %v1192 = vld [vmem:[%s1182 + $0x48] sm:$0xff]
    %v1193 = vld [vmem:[%s1182 + $0x50] sm:$0xff]
    %v1194 = vld [vmem:[%s1182 + $0x58] sm:$0xff]
    %v1198 = vrot.slane %v1167, 1
    %v1199 = vrot.slane %v1168, 1
    %v1200 = vsel %vm240, %v1198, %v1199
    %v1201 = vrot.slane %v1169, 1
    %v1202 = vsel %vm240, %v1199, %v1201
    %v1203 = vsel %vm462, %v1200, 0
    %v1205 = vsel %vm462, %v1202, 0
    %v1207 = vsel %vm462, %v1201, 0
    %1209 = vmatpush.msra.mxu0 0.0
    %1210 = vmatpush.msra.mxu0 0.0
    %1211 = vmatpush.msra.mxu0 0.0
    %1212 = vmatpush.msra.mxu0 0.0
    %1213 = vmatpush.msra.mxu0 %v1194
    %1214 = vmatpush.msra.mxu0 %v1193
    %1215 = vmatpush.msra.mxu0 %v1192
    %1216 = vmatpush.msra.mxu0 %v1191
    %1217 = vmatpush.msra.mxu0 %v1190
    %1218 = vmatpush.msra.mxu0 %v1189
    %1219 = vmatpush.msra.mxu0 %v1188
    %1220 = vmatpush.msra.mxu0 %v1187
    %1221 = vmatpush.msra.mxu0 %v1186
    %1222 = vmatpush.msra.mxu0 %v1185
    %1223 = vmatpush.msra.mxu0 %v1184
    %1224 = vmatpush.msra.mxu0 %v1183
    %1225 = vmatmul.f32.gmra.mxu0 %v1203
    %v1226 = vpop.f32.mrf.mxu0
    %v1227 = vadd.f32 0.0, %v1226
    %1228 = vmatmul.f32.gmra.mxu0 %v1205
    %v1229 = vpop.f32.mrf.mxu0
    %1230 = vmatmul.f32.gmra.mxu0 %v1207
    %v1231 = vpop.f32.mrf.mxu0
    %v1232 = vadd.f32 0.0, %v1231
    %1233 = vdwg.mxu0
    %v1234 = vsel %vm462, %v1167, 0
    %v1236 = vsel %vm462, %v1168, 0
    %v1238 = vsel %vm462, %v1169, 0
    %1240 = vmatpush.msra.mxu0 0.0
    %1241 = vmatpush.msra.mxu0 0.0
    %1242 = vmatpush.msra.mxu0 0.0
    %1243 = vmatpush.msra.mxu0 0.0
    %1244 = vmatpush.msra.mxu0 %v1181
    %1245 = vmatpush.msra.mxu0 %v1180
    %1246 = vmatpush.msra.mxu0 %v1179
    %1247 = vmatpush.msra.mxu0 %v1178
    %1248 = vmatpush.msra.mxu0 %v1177
    %1249 = vmatpush.msra.mxu0 %v1176
    %1250 = vmatpush.msra.mxu0 %v1175
    %1251 = vmatpush.msra.mxu0 %v1174
    %1252 = vmatpush.msra.mxu0 %v1173
    %1253 = vmatpush.msra.mxu0 %v1172
    %1254 = vmatpush.msra.mxu0 %v1171
    %1255 = vmatpush.msra.mxu0 %v1170
    %1256 = vmatmul.f32.gmra.mxu0 %v1234
    %v1257 = vpop.f32.mrf.mxu0
    %v1258 = vadd.f32 %v1227, %v1257
    %1259 = vmatmul.f32.gmra.mxu0 %v1236
    %v1260 = vpop.f32.mrf.mxu0
    %1261 = vmatmul.f32.gmra.mxu0 %v1238
    %v1262 = vpop.f32.mrf.mxu0
    %v1263 = vadd.f32 %v1232, %v1262
    %1264 = vdwg.mxu0
    %s1265 = scalar_lea.vmem %s8, 192
    %v1266 = vld [vmem:[%s1265] sm:$0xff]
    %v1267 = vld [vmem:[%s1265 + $0x8] sm:$0xff]
    %v1268 = vld [vmem:[%s1265 + $0x10] sm:$0xff]
    %v1269 = vld [vmem:[%s1265 + $0x18] sm:$0xff]
    %v1270 = vld [vmem:[%s1265 + $0x20] sm:$0xff]
    %v1271 = vld [vmem:[%s1265 + $0x28] sm:$0xff]
    %v1272 = vld [vmem:[%s1265 + $0x30] sm:$0xff]
    %v1273 = vld [vmem:[%s1265 + $0x38] sm:$0xff]
    %v1274 = vld [vmem:[%s1265 + $0x40] sm:$0xff]
    %v1275 = vld [vmem:[%s1265 + $0x48] sm:$0xff]
    %v1276 = vld [vmem:[%s1265 + $0x50] sm:$0xff]
    %v1277 = vld [vmem:[%s1265 + $0x58] sm:$0xff]
    %v1278 = vrot.slane %v1167, 2
    %v1279 = vrot.slane %v1168, 2
    %v1280 = vsel %vm740, %v1278, %v1279
    %v1281 = vrot.slane %v1169, 2
    %v1282 = vsel %vm740, %v1279, %v1281
    %v1283 = vsel %vm462, %v1280, 0
    %v1285 = vsel %vm462, %v1282, 0
    %v1287 = vsel %vm462, %v1281, 0
    %1289 = vmatpush.msra.mxu0 0.0
    %1290 = vmatpush.msra.mxu0 0.0
    %1291 = vmatpush.msra.mxu0 0.0
    %1292 = vmatpush.msra.mxu0 0.0
    %1293 = vmatpush.msra.mxu0 %v1277
    %1294 = vmatpush.msra.mxu0 %v1276
    %1295 = vmatpush.msra.mxu0 %v1275
    %1296 = vmatpush.msra.mxu0 %v1274
    %1297 = vmatpush.msra.mxu0 %v1273
    %1298 = vmatpush.msra.mxu0 %v1272
    %1299 = vmatpush.msra.mxu0 %v1271
    %1300 = vmatpush.msra.mxu0 %v1270
    %1301 = vmatpush.msra.mxu0 %v1269
    %1302 = vmatpush.msra.mxu0 %v1268
    %1303 = vmatpush.msra.mxu0 %v1267
    %1304 = vmatpush.msra.mxu0 %v1266
    %1305 = vmatmul.f32.gmra.mxu0 %v1283
    %v1306 = vpop.f32.mrf.mxu0
    %v1307 = vadd.f32 0.0, %v1306
    %1308 = vmatmul.f32.gmra.mxu0 %v1285
    %v1309 = vpop.f32.mrf.mxu0
    %1310 = vmatmul.f32.gmra.mxu0 %v1287
    %v1311 = vpop.f32.mrf.mxu0
    %v1312 = vadd.f32 0.0, %v1311
    %1313 = vdwg.mxu0
    %v1314 = vadd.f32 %v1258, %v1307
    %v1315 = vadd.f32 %v1263, %v1312
    %v1316 = vld [vmem:[%s9] sm:$0x1]
    %v1318 = vperm.slane %v1316, 0
    %v1320 = vadd.f32 %v1314, %v1318
    %v1321 = vadd.f32 %v1315, %v1318
    %v1322 = vmax.f32 %v1320, 0.0
    %v1323 = vmax.f32 %v1321, 0.0
    %v1325 = vrot.slane %v1323, 7
    %vm1327 = vcmask 1040384
    %v1328 = vsel %vm1327, %v1322, %v1325
    %v1329 = vld [vmem:[%s10] sm:$0xff]
    %v1330 = vld [vmem:[%s10 + $0x8] sm:$0xff]
    %v1331 = vld [vmem:[%s10 + $0x10] sm:$0xff]
    %v1332 = vld [vmem:[%s10 + $0x18] sm:$0xff]
    %v1333 = vld [vmem:[%s11] sm:$0x1]
    %v1335 = vperm.slane %v1333, 0
    %v1338 = vsel %vm948, %v1328, 0
    %1340 = vmatpush.msra.mxu0 0.0
    %1341 = vmatpush.msra.mxu0 0.0
    %1342 = vmatpush.msra.mxu0 0.0
    %1343 = vmatpush.msra.mxu0 0.0
    %1344 = vmatpush.msra.mxu0 0.0
    %1345 = vmatpush.msra.mxu0 0.0
    %1346 = vmatpush.msra.mxu0 0.0
    %1347 = vmatpush.msra.mxu0 0.0
    %1348 = vmatpush.msra.mxu0 0.0
    %1349 = vmatpush.msra.mxu0 0.0
    %1350 = vmatpush.msra.mxu0 0.0
    %1351 = vmatpush.msra.mxu0 0.0
    %1352 = vmatpush.msra.mxu0 %v1332
    %1353 = vmatpush.msra.mxu0 %v1331
    %1354 = vmatpush.msra.mxu0 %v1330
    %1355 = vmatpush.msra.mxu0 %v1329
    %1356 = vmatmul.f32.gmra.mxu0 %v1338
    %v1357 = vpop.f32.mrf.mxu0
    %v1358 = vadd.f32 %v1335, %v1357
    %1359 = vdwg.mxu0
    %vm1360 = vcmask 254976
    %v1361 = vsel %vm1360, %v1358, 0.0
    %1362 = vadd.xlane.f32.xlu0 %v1361
    %v1363 = vpop.xlane.xlu0 %1362
    %v1364 = vrcp.pop 32.0
    %v1365 = vmul.f32 32.0, %v1364
    %v1366 = vsub.f32 1.0, %v1365
    %v1367 = vmul.f32 %v1364, %v1366
    %v1368 = vadd.f32 %v1364, %v1367
    %vm1369 = vweird.f32 %v1364
    %v1370 = vsel %vm1369, %v1364, %v1368
    %v1371 = vmul.f32 %v1363, %v1370
    %v1372 = vsub.f32 %v1358, %v1371
    %v1373 = vmul.f32 %v1372, %v1372
    %v1374 = vsel %vm1360, %v1373, 0.0
    %1375 = vadd.xlane.f32.xlu0 %v1374
    %v1376 = vpop.xlane.xlu0 %1375
    %v1377 = vmul.f32 %v1376, %v1370
    %v1378 = vadd.f32 %v1377, 1e-05
    %v1379 = vrsqrt.pop %v1378
    %v1380 = vmul.f32 %v1379, %v1378
    %v1381 = vmul.f32 %v1380, %v1379
    %v1382 = vmul.f32 0.5, %v1381
    %v1383 = vsub.f32 1.5, %v1382
    %v1384 = vmul.f32 %v1379, %v1383
    %vm1385 = vweird.f32 %v1378
    %vm1386 = vweird.f32 %v1379
    %vm1387 = vmor %vm1385, %vm1386
    %v1388 = vsel %vm1387, %v1379, %v1384
    %v1389 = vmul.f32 %v1372, %v1388
    %v1390 = vld [vmem:[%s12] sm:$0x1]
    %v1392 = vperm.slane %v1390, 0
    %v1394 = vmul.f32 %v1389, %v1392
    %v1395 = vld [vmem:[%s13] sm:$0x1]
    %v1397 = vperm.slane %v1395, 0
    %v1399 = vadd.f32 %v1394, %v1397
    %v1400 = vtanh.pop %v1399
    %v1401 = vld [vmem:[%s1] sm:$0x3]
    %v1402 = vld [vmem:[%s14] sm:$0xff]
    %v1403 = vld [vmem:[%s14 + $0x8] sm:$0xff]
    %v1404 = vld [vmem:[%s14 + $0x10] sm:$0xff]
    %v1405 = vld [vmem:[%s14 + $0x18] sm:$0xff]
    %v1406 = vld [vmem:[%s15] sm:$0xf]
    %vm1407 = vcmask 31744
    %v1409 = vsel %vm1407, %v1401, 0
    %vm1411 = vcmask 1043456
    %v1413 = vsel %vm1411, %v1406, 0
    %1415 = vmatpush.msra.mxu0 0.0
    %1416 = vmatpush.msra.mxu0 0.0
    %1417 = vmatpush.msra.mxu0 0.0
    %1418 = vmatpush.msra.mxu0 0.0
    %1419 = vmatpush.msra.mxu0 0.0
    %1420 = vmatpush.msra.mxu0 0.0
    %1421 = vmatpush.msra.mxu0 0.0
    %1422 = vmatpush.msra.mxu0 0.0
    %1423 = vmatpush.msra.mxu0 0.0
    %1424 = vmatpush.msra.mxu0 0.0
    %1425 = vmatpush.msra.mxu0 0.0
    %1426 = vmatpush.msra.mxu0 0.0
    %1427 = vmatpush.msra.mxu0 0.0
    %1428 = vmatpush.msra.mxu0 0.0
    %1429 = vmatpush.msra.mxu0 0.0
    %1430 = vmatpush.msra.mxu0 %v1413
    %1431 = vmatmul.f32.gmra.mxu0 %v1409
    %v1432 = vpop.f32.mrf.mxu0
    %v1433 = vadd.f32 0.0, %v1432
    %1434 = vdwg.mxu0
    %v1436 = vsel %vm948, %v1400, 0
    %1438 = vmatpush.msra.mxu0 0.0
    %1439 = vmatpush.msra.mxu0 0.0
    %1440 = vmatpush.msra.mxu0 0.0
    %1441 = vmatpush.msra.mxu0 0.0
    %1442 = vmatpush.msra.mxu0 0.0
    %1443 = vmatpush.msra.mxu0 0.0
    %1444 = vmatpush.msra.mxu0 0.0
    %1445 = vmatpush.msra.mxu0 0.0
    %1446 = vmatpush.msra.mxu0 0.0
    %1447 = vmatpush.msra.mxu0 0.0
    %1448 = vmatpush.msra.mxu0 0.0
    %1449 = vmatpush.msra.mxu0 0.0
    %1450 = vmatpush.msra.mxu0 %v1405
    %1451 = vmatpush.msra.mxu0 %v1404
    %1452 = vmatpush.msra.mxu0 %v1403
    %1453 = vmatpush.msra.mxu0 %v1402
    %1454 = vmatmul.f32.gmra.mxu0 %v1436
    %v1455 = vpop.f32.mrf.mxu0
    %v1456 = vadd.f32 %v1433, %v1455
    %1457 = vdwg.mxu0
    %v1458 = vld [vmem:[%s16] sm:$0x1]
    %v1460 = vperm.slane %v1458, 0
    %v1462 = vadd.f32 %v1456, %v1460
    %v1463 = vmax.f32 %v1462, 0.0
    %v1464 = vld [vmem:[%s17] sm:$0xff]
    %v1465 = vld [vmem:[%s17 + $0x8] sm:$0xff]
    %v1466 = vld [vmem:[%s17 + $0x10] sm:$0xff]
    %v1467 = vld [vmem:[%s17 + $0x18] sm:$0xff]
    %v1468 = vld [vmem:[%s17 + $0x20] sm:$0xff]
    %v1469 = vld [vmem:[%s17 + $0x28] sm:$0xff]
    %v1470 = vld [vmem:[%s17 + $0x30] sm:$0xff]
    %v1471 = vld [vmem:[%s17 + $0x38] sm:$0xff]
    %v1472 = vld [vmem:[%s18] sm:$0x1]
    %v1474 = vperm.slane %v1472, 0
    %v1477 = vsel %vm106, %v1463, 0
    %1479 = vmatpush.msra.mxu0 0.0
    %1480 = vmatpush.msra.mxu0 0.0
    %1481 = vmatpush.msra.mxu0 0.0
    %1482 = vmatpush.msra.mxu0 0.0
    %1483 = vmatpush.msra.mxu0 0.0
    %1484 = vmatpush.msra.mxu0 0.0
    %1485 = vmatpush.msra.mxu0 0.0
    %1486 = vmatpush.msra.mxu0 0.0
    %1487 = vmatpush.msra.mxu0 %v1471
    %1488 = vmatpush.msra.mxu0 %v1470
    %1489 = vmatpush.msra.mxu0 %v1469
    %1490 = vmatpush.msra.mxu0 %v1468
    %1491 = vmatpush.msra.mxu0 %v1467
    %1492 = vmatpush.msra.mxu0 %v1466
    %1493 = vmatpush.msra.mxu0 %v1465
    %1494 = vmatpush.msra.mxu0 %v1464
    %1495 = vmatmul.f32.gmra.mxu0 %v1477
    %v1496 = vpop.f32.mrf.mxu0
    %v1497 = vadd.f32 %v1474, %v1496
    %1498 = vdwg.mxu0
    %v1499 = vmax.f32 %v1497, 0.0
    %v1500 = vld [vmem:[%s19] sm:$0xff]
    %v1501 = vld [vmem:[%s19 + $0x8] sm:$0xff]
    %v1502 = vld [vmem:[%s19 + $0x10] sm:$0xff]
    %v1503 = vld [vmem:[%s19 + $0x18] sm:$0xff]
    %v1504 = vld [vmem:[%s19 + $0x20] sm:$0xff]
    %v1505 = vld [vmem:[%s19 + $0x28] sm:$0xff]
    %v1506 = vld [vmem:[%s19 + $0x30] sm:$0xff]
    %v1507 = vld [vmem:[%s19 + $0x38] sm:$0xff]
    %v1508 = vld [vmem:[%s20] sm:$0x1]
    %v1510 = vperm.slane %v1508, 0
    %v1513 = vsel %vm106, %v1499, 0
    %1515 = vmatpush.msra.mxu0 0.0
    %1516 = vmatpush.msra.mxu0 0.0
    %1517 = vmatpush.msra.mxu0 0.0
    %1518 = vmatpush.msra.mxu0 0.0
    %1519 = vmatpush.msra.mxu0 0.0
    %1520 = vmatpush.msra.mxu0 0.0
    %1521 = vmatpush.msra.mxu0 0.0
    %1522 = vmatpush.msra.mxu0 0.0
    %1523 = vmatpush.msra.mxu0 %v1507
    %1524 = vmatpush.msra.mxu0 %v1506
    %1525 = vmatpush.msra.mxu0 %v1505
    %1526 = vmatpush.msra.mxu0 %v1504
    %1527 = vmatpush.msra.mxu0 %v1503
    %1528 = vmatpush.msra.mxu0 %v1502
    %1529 = vmatpush.msra.mxu0 %v1501
    %1530 = vmatpush.msra.mxu0 %v1500
    %1531 = vmatmul.f32.gmra.mxu0 %v1513
    %v1532 = vpop.f32.mrf.mxu0
    %v1533 = vadd.f32 %v1510, %v1532
    %1534 = vdwg.mxu0
    %vm1535 = vcmask 9216
    %1536 = vst.msk [vmem:[#allocation2] sm:$0x3] %vm1535, %v1533
    // Predicated region
    $region86: #{tpu_custom_call.1} parent=1 // pred_check
      _
    $region87: #{tpu_custom_call.1} parent=1 // pred_check_branch
      %1538 = sbr.rel (0) target = $region89
    $region88: #{tpu_custom_call.1} parent=1 // pred_region
      %1540 = vsyncadd [#allocation3], 0
      %s1542 = sshll.u32 [#allocation2], 4
      %s1543 = int_to_ptr.vmem [resolvable:$true] %s1542
      %s1544 = sshll.u32 %s21, 4
      %s1545 = int_to_ptr.hbm [resolvable:$true] %s1544
      %1547 = dma.vmem_to_hbm [thread:$0]  %s1543, 32, %s1545, [#allocation3]
    $region89: #{tpu_custom_call.1} parent=1 // pred_fallthru
      _
    // Predicated region
    $region90: #{tpu_custom_call.1} parent=1 // pred_check
      _
    $region91: #{tpu_custom_call.1} parent=1 // pred_check_branch
      %1549 = sbr.rel (0) target = $region93
    $region92: #{tpu_custom_call.1} parent=1 // pred_region
      %1551 = dma.done [#allocation3], 32
    $region93: #{tpu_custom_call.1} parent=1 // pred_fallthru
      _
    %1552 = vsyncpa [#allocation3], 1

</llo_original>
